<compile_context>
chip_gen: v6e
topology: v6e:2x2x1
jax: 0.10.0
libtpu: 0.0.40
codegen_flags: <defaults>
</compile_context>

<pallas_src>
import functools
import math

import jax
import jax.numpy as jnp
from jax import lax
from jax.experimental import pallas as pl
from jax.experimental.pallas import tpu as pltpu

_NEG_INF = -1e30  # finite "minus infinity" for masking out-of-range kv columns


def _vmem_limit_bytes():
    """Scoped-VMEM limit: ~48 MiB on v7x (64 MiB phys), 64 MiB on v5e/v6e."""
    try:
        cap = pltpu.get_tpu_info().vmem_capacity_bytes
    except Exception:
        cap = 64 * 1024 * 1024          # conservative fallback (v7x-sized)
    return max(32 * 1024 * 1024, min(cap - 16 * 1024 * 1024, 64 * 1024 * 1024))


def _flash_qkv_kernel(q_ref, k_ref, v_ref, o_ref, qs_ref, m_ref, l_ref,
                      acc_ref, *, scale2, kv_tile, seq_len, needs_mask,
                      exp_dtype, approx_recip):
    """One (batch, head-block, q-tile, kv-tile) grid step.

    q_ref: [hb, C, tq]   k_ref / v_ref: [hb, C, tk]   o_ref: [hb, C, tq]
    Scores are kept as [hb, tk, tq] so the accumulator shares the output's
    lane-dense [hb, C, tq] layout (no transpose anywhere).
    """
    ki = pl.program_id(3)

    @pl.when(ki == 0)
    def _init():
        # q is invariant across the kv loop: scale it once and stash it.
        qs_ref[...] = q_ref[...] * scale2
        m_ref[...] = jnp.full(m_ref.shape, -jnp.inf, dtype=jnp.float32)
        l_ref[...] = jnp.zeros(l_ref.shape, dtype=jnp.float32)
        acc_ref[...] = jnp.zeros(acc_ref.shape, dtype=jnp.float32)

    q = qs_ref[...]                  # [hb, C, tq], input dtype, pre-scaled
    k = k_ref[...]                   # [hb, C, tk]
    v = v_ref[...]                   # [hb, C, tk]

    # s[h, s_kv, t] = sum_c k[h, c, s_kv] * q[h, c, t]   ('bct,bcs->bts' transposed)
    s = lax.dot_general(
        k, q,
        dimension_numbers=(((1,), (1,)), ((0,), (0,))),
        preferred_element_type=jnp.float32)                    # [hb, tk, tq] f32

    if needs_mask:  # static flag: only compiled in when T % kv_tile != 0
        # Only the last kv block can hold out-of-range columns; the selects are
        # cheap next to the matmul + exp, so they are applied on every step.
        kv_pos = ki * kv_tile + lax.broadcasted_iota(jnp.int32, s.shape, 1)
        s = jnp.where(kv_pos < seq_len, s, _NEG_INF)
        # Zero padded V columns so garbage (possibly Inf/NaN) in the partial
        # block can never reach the accumulator through 0 * garbage.
        v_pos = ki * kv_tile + lax.broadcasted_iota(jnp.int32, v.shape, 2)
        v = jnp.where(v_pos < seq_len, v, 0)

    # Online softmax over the kv axis (axis=1); statistics stay in f32.
    m_prev = m_ref[...]                                        # [hb, 1, tq]
    m_new = jnp.maximum(m_prev, jnp.max(s, axis=1, keepdims=True))
    alpha = jnp.exp(m_prev - m_new)                            # [hb, 1, tq]
    # exp in bf16 when the inputs are bf16 (bf16 EUP on v6e/v7x), f32 otherwise.
    p = jnp.exp((s - m_new).astype(exp_dtype))                 # [hb, tk, tq]
    l_ref[...] = alpha * l_ref[...] + jnp.sum(
        p.astype(jnp.float32), axis=1, keepdims=True)

    # a[h, c, t] = sum_s v[h, c, s] * p[h, s, t]; weights in the value dtype
    # (as the PyTorch module does) so the PV matmul stays MXU-native.
    pv = lax.dot_general(
        v, p.astype(v.dtype),
        dimension_numbers=(((2,), (1,)), ((0,), (0,))),
        preferred_element_type=jnp.float32)                    # [hb, C, tq]
    acc_ref[...] = alpha * acc_ref[...] + pv
    m_ref[...] = m_new

    @pl.when(ki == pl.num_programs(3) - 1)
    def _finalize():
        inv_l = pl.reciprocal(l_ref[...], approx=approx_recip)
        o_ref[...] = (acc_ref[...] * inv_l).astype(o_ref.dtype)


def qkv_attention(qkv, n_heads, *, q_tile=256, kv_tile=2048, interpret=False):
    """Pallas equivalent of QKVAttention.forward.

    qkv: [N, 3*H*C, T]  ->  [N, H*C, T]
    """
    N, width, T = qkv.shape
    assert width % (3 * n_heads) == 0
    H = n_heads
    C = width // (3 * H)
    dtype = qkv.dtype
    in_b = dtype.itemsize
    # Reference scales q and k each by 1/ch**0.25; fold into one multiply on q
    # (= 1/sqrt(ch)); with f32 accumulation the difference is ULP-level.
    scale2 = 1.0 / math.sqrt(C)

    # [N, 3*H*C, T] -> [N, 3, H, C, T]: free reshape; q/k/v selected by BlockSpec.
    qkv5 = qkv.reshape(N, 3, H, C, T)

    # ---- tile selection -----------------------------------------------------
    if T <= kv_tile:
        tq = tk = T                          # whole row fits: single kv step
    else:
        assert q_tile % 128 == 0 and kv_tile % 128 == 0 and q_tile <= kv_tile
        tq, tk = q_tile, kv_tile
    n_q = pl.cdiv(T, tq)
    n_k = pl.cdiv(T, tk)
    needs_mask = (T % tk) != 0               # only the last kv block is partial

    # ---- head blocking sized from VMEM --------------------------------------
    vmem_limit = _vmem_limit_bytes()
    per_head_bytes = (
        2 * C * tq * in_b                    # q block + scaled-q scratch
        + 2 * 2 * C * tk * in_b              # k and v blocks (double-buffered)
        + 2 * C * tq * in_b                  # output block (double-buffered)
        + C * tq * 4                         # f32 accumulator
        + 2 * tq * 4                         # m, l
        + 4 * tk * tq * 4                    # live f32 score/prob temporaries
    )
    budget = vmem_limit // 2                 # headroom for compiler scratch/spill
    hb = 1
    while hb < H and H % (2 * hb) == 0 and 2 * hb * per_head_bytes <= budget:
        hb *= 2
    # Keep >= 2 units of parallel work so v7x's two TensorCores both engage.
    while hb > 1 and N * (H // hb) * n_q < 2:
        hb //= 2

    grid = (N, H // hb, n_q, n_k)            # kv reduction axis last

    q_spec = pl.BlockSpec((None, None, hb, C, tq),
                          lambda n, h, qi, ki: (n, 0, h, 0, qi))
    k_spec = pl.BlockSpec((None, None, hb, C, tk),
                          lambda n, h, qi, ki: (n, 1, h, 0, ki))
    v_spec = pl.BlockSpec((None, None, hb, C, tk),
                          lambda n, h, qi, ki: (n, 2, h, 0, ki))
    o_spec = pl.BlockSpec((None, hb, C, tq),
                          lambda n, h, qi, ki: (n, h, 0, qi))

    exp_dtype = jnp.bfloat16 if dtype == jnp.bfloat16 else jnp.float32
    cost = pl.CostEstimate(
        flops=int(4 * N * H * C * T * T),            # QK^T + PV
        transcendentals=int(N * H * T * T),          # one exp per score
        bytes_accessed=int(4 * N * H * C * T * in_b))

    out = pl.pallas_call(
        functools.partial(_flash_qkv_kernel, scale2=scale2, kv_tile=tk,
                          seq_len=T, needs_mask=needs_mask,
                          exp_dtype=exp_dtype, approx_recip=(in_b <= 2)),
        out_shape=jax.ShapeDtypeStruct((N, H, C, T), dtype),
        grid=grid,
        in_specs=[q_spec, k_spec, v_spec],
        out_specs=o_spec,
        scratch_shapes=[
            pltpu.VMEM((hb, C, tq), dtype),          # q * scale (kv-invariant)
            pltpu.VMEM((hb, 1, tq), jnp.float32),    # running max  m
            pltpu.VMEM((hb, 1, tq), jnp.float32),    # running sum  l
            pltpu.VMEM((hb, C, tq), jnp.float32),    # f32 output accumulator
        ],
        compiler_params=pltpu.CompilerParams(
            dimension_semantics=("parallel", "parallel", "parallel", "arbitrary"),
            vmem_limit_bytes=vmem_limit),
        cost_estimate=cost,
        interpret=interpret,
    )(qkv5, qkv5, qkv5)   # same array, three views (q / k / v regions)

    return out.reshape(N, H * C, T)


def qkv_attention_ref(qkv, n_heads):
    """Pure-JAX reference mirroring the PyTorch module exactly."""
    N, width, T = qkv.shape
    ch = width // (3 * n_heads)
    q, k, v = jnp.split(qkv, 3, axis=1)
    q = q.reshape(N * n_heads, ch, T)
    k = k.reshape(N * n_heads, ch, T)
    v = v.reshape(N * n_heads, ch, T)
    scale = 1.0 / math.sqrt(math.sqrt(ch))
    w = jnp.einsum('bct,bcs->bts', q * scale, k * scale)
    w = jax.nn.softmax(w.astype(jnp.float32), axis=-1).astype(w.dtype)
    a = jnp.einsum('bts,bcs->bct', w, v)
    return a.reshape(N, -1, T)


if __name__ == "__main__":
    key = jax.random.PRNGKey(0)

    # 1) Small fp32 case: N=2 batch, H=4 heads, C=16 ch/head, T=64 tokens.
    N, H, C, T = 2, 4, 16, 64
    qkv = jax.random.normal(key, (N, 3 * H * C, T), dtype=jnp.float32)
    out = jax.block_until_ready(qkv_attention(qkv, n_heads=H))
    ref = qkv_attention_ref(qkv, n_heads=H)
    assert out.shape == (N, H * C, T), out.shape
    assert jnp.allclose(out, ref, atol=2e-3, rtol=2e-3), "fp32 mismatch vs reference"

    # 2) Ragged T exercising flash tiling, the in-kernel kv mask and partial
    #    q/output blocks (T % tile != 0, no host-side padding).
    N2, H2, C2, T2 = 1, 2, 32, 640
    qkv2 = jax.random.normal(jax.random.PRNGKey(0), (N2, 3 * H2 * C2, T2),
                             dtype=jnp.float32)
    out2 = jax.block_until_ready(
        qkv_attention(qkv2, n_heads=H2, q_tile=256, kv_tile=256))
    ref2 = qkv_attention_ref(qkv2, n_heads=H2)
    assert out2.shape == (N2, H2 * C2, T2), out2.shape
    assert jnp.allclose(out2, ref2, atol=2e-3, rtol=2e-3), "tiled mismatch vs reference"

    # 3) bf16 operands (native MXU + bf16 exp path) with f32 softmax statistics.
    qkv_bf16 = qkv.astype(jnp.bfloat16)
    out3 = jax.block_until_ready(qkv_attention(qkv_bf16, n_heads=H))
    ref3 = qkv_attention_ref(qkv_bf16, n_heads=H).astype(jnp.float32)
    assert out3.dtype == jnp.bfloat16
    assert jnp.allclose(out3.astype(jnp.float32), ref3, atol=5e-2, rtol=5e-2), \
        "bf16 mismatch vs reference"

    print("KERNEL_OK")
</pallas_src>

<mosaic_0001>
module attributes {stable_mosaic.version = 11 : i64} {
  func.func @_flash_qkv_kernel(%arg0: i32, %arg1: i32, %arg2: i32, %arg3: i32, %arg4: memref<1x1x4x16x64xf32, #tpu.memory_space<vmem>>, %arg5: memref<1x1x4x16x64xf32, #tpu.memory_space<vmem>>, %arg6: memref<1x1x4x16x64xf32, #tpu.memory_space<vmem>>, %arg7: memref<1x4x16x64xf32, #tpu.memory_space<vmem>>, %arg8: memref<4x16x64xf32, #tpu.memory_space<vmem>>, %arg9: memref<4x1x64xf32, #tpu.memory_space<vmem>>, %arg10: memref<4x1x64xf32, #tpu.memory_space<vmem>>, %arg11: memref<4x16x64xf32, #tpu.memory_space<vmem>>) attributes {dimension_semantics = [#tpu.dimension_semantics<parallel>, #tpu.dimension_semantics<parallel>, #tpu.dimension_semantics<parallel>, #tpu.dimension_semantics<arbitrary>], iteration_bounds = array<i64: 2, 1, 1, 1>, scalar_prefetch = 0 : i64, scratch_operands = 4 : i64, tpu.core_type = #tpu.core_type<tc>, window_params = [{transform_indices = @transform_0, window_bounds = array<i64: 1, 1, 4, 16, 64>}, {transform_indices = @transform_1, window_bounds = array<i64: 1, 1, 4, 16, 64>}, {transform_indices = @transform_2, window_bounds = array<i64: 1, 1, 4, 16, 64>}, {transform_indices = @transform_3, window_bounds = array<i64: 1, 4, 16, 64>}]} {
    %c0_i32 = arith.constant 0 : i32
    %0 = arith.cmpi eq, %arg3, %c0_i32 : i32
    %1 = arith.extui %0 : i1 to i32
    %c0_i32_0 = arith.constant 0 : i32
    %2 = arith.cmpi ne, %1, %c0_i32_0 : i32
    scf.if %2 {
      %c0_36 = arith.constant 0 : index
      %c0_37 = arith.constant 0 : index
      %c0_38 = arith.constant 0 : index
      %c0_39 = arith.constant 0 : index
      %c0_40 = arith.constant 0 : index
      %34 = vector.load %arg4[%c0_36, %c0_37, %c0_38, %c0_39, %c0_40] : memref<1x1x4x16x64xf32, #tpu.memory_space<vmem>>, vector<1x1x4x16x64xf32>
      %35 = vector.shape_cast %34 : vector<1x1x4x16x64xf32> to vector<4x16x64xf32>
      %cst_41 = arith.constant 2.500000e-01 : f32
      %36 = vector.broadcast %cst_41 : f32 to vector<4x16x64xf32>
      %37 = arith.mulf %35, %36 : vector<4x16x64xf32>
      %c0_42 = arith.constant 0 : index
      %c0_43 = arith.constant 0 : index
      %c0_44 = arith.constant 0 : index
      %38 = vector.load %arg8[%c0_42, %c0_43, %c0_44] : memref<4x16x64xf32, #tpu.memory_space<vmem>>, vector<4x16x64xf32>
      tpu.vector_store %arg8[%c0_42, %c0_43, %c0_44], %37 {strides = array<i32>} : memref<4x16x64xf32, #tpu.memory_space<vmem>>, vector<4x16x64xf32>,
      %cst_45 = arith.constant 0xFF800000 : f32
      %39 = vector.broadcast %cst_45 : f32 to vector<4x1x64xf32>
      %c0_46 = arith.constant 0 : index
      %c0_47 = arith.constant 0 : index
      %c0_48 = arith.constant 0 : index
      %40 = vector.load %arg9[%c0_46, %c0_47, %c0_48] : memref<4x1x64xf32, #tpu.memory_space<vmem>>, vector<4x1x64xf32>
      tpu.vector_store %arg9[%c0_46, %c0_47, %c0_48], %39 {strides = array<i32>} : memref<4x1x64xf32, #tpu.memory_space<vmem>>, vector<4x1x64xf32>,
      %cst_49 = arith.constant 0.000000e+00 : f32
      %41 = vector.broadcast %cst_49 : f32 to vector<4x1x64xf32>
      %c0_50 = arith.constant 0 : index
      %c0_51 = arith.constant 0 : index
      %c0_52 = arith.constant 0 : index
      %42 = vector.load %arg10[%c0_50, %c0_51, %c0_52] : memref<4x1x64xf32, #tpu.memory_space<vmem>>, vector<4x1x64xf32>
      tpu.vector_store %arg10[%c0_50, %c0_51, %c0_52], %41 {strides = array<i32>} : memref<4x1x64xf32, #tpu.memory_space<vmem>>, vector<4x1x64xf32>,
      %cst_53 = arith.constant 0.000000e+00 : f32
      %43 = vector.broadcast %cst_53 : f32 to vector<4x16x64xf32>
      %c0_54 = arith.constant 0 : index
      %c0_55 = arith.constant 0 : index
      %c0_56 = arith.constant 0 : index
      %44 = vector.load %arg11[%c0_54, %c0_55, %c0_56] : memref<4x16x64xf32, #tpu.memory_space<vmem>>, vector<4x16x64xf32>
      tpu.vector_store %arg11[%c0_54, %c0_55, %c0_56], %43 {strides = array<i32>} : memref<4x16x64xf32, #tpu.memory_space<vmem>>, vector<4x16x64xf32>,
    } else {
    }
    %c0 = arith.constant 0 : index
    %c0_1 = arith.constant 0 : index
    %c0_2 = arith.constant 0 : index
    %3 = vector.load %arg8[%c0, %c0_1, %c0_2] : memref<4x16x64xf32, #tpu.memory_space<vmem>>, vector<4x16x64xf32>
    %c0_3 = arith.constant 0 : index
    %c0_4 = arith.constant 0 : index
    %c0_5 = arith.constant 0 : index
    %c0_6 = arith.constant 0 : index
    %c0_7 = arith.constant 0 : index
    %4 = vector.load %arg5[%c0_3, %c0_4, %c0_5, %c0_6, %c0_7] : memref<1x1x4x16x64xf32, #tpu.memory_space<vmem>>, vector<1x1x4x16x64xf32>
    %5 = vector.shape_cast %4 : vector<1x1x4x16x64xf32> to vector<4x16x64xf32>
    %c0_8 = arith.constant 0 : index
    %c0_9 = arith.constant 0 : index
    %c0_10 = arith.constant 0 : index
    %c0_11 = arith.constant 0 : index
    %c0_12 = arith.constant 0 : index
    %6 = vector.load %arg6[%c0_8, %c0_9, %c0_10, %c0_11, %c0_12] : memref<1x1x4x16x64xf32, #tpu.memory_space<vmem>>, vector<1x1x4x16x64xf32>
    %7 = vector.shape_cast %6 : vector<1x1x4x16x64xf32> to vector<4x16x64xf32>
    %cst = arith.constant dense<0.000000e+00> : vector<4x64x64xf32>
    %8 = tpu.matmul %5, %3, %cst {dimension_numbers = #tpu.dot_dimension_numbers<[1], [1], [2], [2], [0, 0, 0, 2, 1, 2], [0], [0]>} : vector<4x16x64xf32>, vector<4x16x64xf32>, vector<4x64x64xf32> -> vector<4x64x64xf32>
    %c0_13 = arith.constant 0 : index
    %c0_14 = arith.constant 0 : index
    %c0_15 = arith.constant 0 : index
    %9 = vector.load %arg9[%c0_13, %c0_14, %c0_15] : memref<4x1x64xf32, #tpu.memory_space<vmem>>, vector<4x1x64xf32>
    %cst_16 = arith.constant dense<0xFF800000> : vector<4x64xf32>
    %10 = vector.multi_reduction <maximumf>, %8, %cst_16 [1] : vector<4x64x64xf32> to vector<4x64xf32>
    %11 = vector.shape_cast %10 : vector<4x64xf32> to vector<4x1x64xf32>
    %12 = arith.maximumf %9, %11 : vector<4x1x64xf32>
    %13 = arith.subf %9, %12 : vector<4x1x64xf32>
    %14 = math.exp %13 : vector<4x1x64xf32>
    %15 = vector.broadcast %12 : vector<4x1x64xf32> to vector<4x64x64xf32>
    %16 = arith.subf %8, %15 : vector<4x64x64xf32>
    %17 = math.exp %16 : vector<4x64x64xf32>
    %c0_17 = arith.constant 0 : index
    %c0_18 = arith.constant 0 : index
    %c0_19 = arith.constant 0 : index
    %18 = vector.load %arg10[%c0_17, %c0_18, %c0_19] : memref<4x1x64xf32, #tpu.memory_space<vmem>>, vector<4x1x64xf32>
    %19 = arith.mulf %14, %18 : vector<4x1x64xf32>
    %cst_20 = arith.constant dense<0.000000e+00> : vector<4x64xf32>
    %20 = vector.multi_reduction <add>, %17, %cst_20 [1] : vector<4x64x64xf32> to vector<4x64xf32>
    %21 = vector.shape_cast %20 : vector<4x64xf32> to vector<4x1x64xf32>
    %22 = arith.addf %19, %21 : vector<4x1x64xf32>
    %c0_21 = arith.constant 0 : index
    %c0_22 = arith.constant 0 : index
    %c0_23 = arith.constant 0 : index
    %23 = vector.load %arg10[%c0_21, %c0_22, %c0_23] : memref<4x1x64xf32, #tpu.memory_space<vmem>>, vector<4x1x64xf32>
    tpu.vector_store %arg10[%c0_21, %c0_22, %c0_23], %22 {strides = array<i32>} : memref<4x1x64xf32, #tpu.memory_space<vmem>>, vector<4x1x64xf32>,
    %cst_24 = arith.constant dense<0.000000e+00> : vector<4x16x64xf32>
    %24 = tpu.matmul %7, %17, %cst_24 {dimension_numbers = #tpu.dot_dimension_numbers<[2], [1], [1], [2], [0, 0, 0, 1, 1, 2], [0], [0]>} : vector<4x16x64xf32>, vector<4x64x64xf32>, vector<4x16x64xf32> -> vector<4x16x64xf32>
    %c0_25 = arith.constant 0 : index
    %c0_26 = arith.constant 0 : index
    %c0_27 = arith.constant 0 : index
    %25 = vector.load %arg11[%c0_25, %c0_26, %c0_27] : memref<4x16x64xf32, #tpu.memory_space<vmem>>, vector<4x16x64xf32>
    %26 = vector.broadcast %14 : vector<4x1x64xf32> to vector<4x16x64xf32>
    %27 = arith.mulf %26, %25 : vector<4x16x64xf32>
    %28 = arith.addf %27, %24 : vector<4x16x64xf32>
    %c0_28 = arith.constant 0 : index
    %c0_29 = arith.constant 0 : index
    %c0_30 = arith.constant 0 : index
    %29 = vector.load %arg11[%c0_28, %c0_29, %c0_30] : memref<4x16x64xf32, #tpu.memory_space<vmem>>, vector<4x16x64xf32>
    tpu.vector_store %arg11[%c0_28, %c0_29, %c0_30], %28 {strides = array<i32>} : memref<4x16x64xf32, #tpu.memory_space<vmem>>, vector<4x16x64xf32>,
    %c0_31 = arith.constant 0 : index
    %c0_32 = arith.constant 0 : index
    %c0_33 = arith.constant 0 : index
    %30 = vector.load %arg9[%c0_31, %c0_32, %c0_33] : memref<4x1x64xf32, #tpu.memory_space<vmem>>, vector<4x1x64xf32>
    tpu.vector_store %arg9[%c0_31, %c0_32, %c0_33], %12 {strides = array<i32>} : memref<4x1x64xf32, #tpu.memory_space<vmem>>, vector<4x1x64xf32>,
    %c0_i32_34 = arith.constant 0 : i32
    %31 = arith.cmpi eq, %arg3, %c0_i32_34 : i32
    %32 = arith.extui %31 : i1 to i32
    %c0_i32_35 = arith.constant 0 : i32
    %33 = arith.cmpi ne, %32, %c0_i32_35 : i32
    scf.if %33 {
      %c0_36 = arith.constant 0 : index
      %c0_37 = arith.constant 0 : index
      %c0_38 = arith.constant 0 : index
      %34 = vector.load %arg10[%c0_36, %c0_37, %c0_38] : memref<4x1x64xf32, #tpu.memory_space<vmem>>, vector<4x1x64xf32>
      %35 = tpu.reciprocal %34 : vector<4x1x64xf32> -> vector<4x1x64xf32>
      %c0_39 = arith.constant 0 : index
      %c0_40 = arith.constant 0 : index
      %c0_41 = arith.constant 0 : index
      %36 = vector.load %arg11[%c0_39, %c0_40, %c0_41] : memref<4x16x64xf32, #tpu.memory_space<vmem>>, vector<4x16x64xf32>
      %37 = vector.broadcast %35 : vector<4x1x64xf32> to vector<4x16x64xf32>
      %38 = arith.mulf %36, %37 : vector<4x16x64xf32>
      %c0_42 = arith.constant 0 : index
      %c0_43 = arith.constant 0 : index
      %c0_44 = arith.constant 0 : index
      %c0_45 = arith.constant 0 : index
      %39 = vector.load %arg7[%c0_42, %c0_43, %c0_44, %c0_45] : memref<1x4x16x64xf32, #tpu.memory_space<vmem>>, vector<1x4x16x64xf32>
      %40 = vector.shape_cast %39 : vector<1x4x16x64xf32> to vector<4x16x64xf32>
      %41 = vector.shape_cast %38 : vector<4x16x64xf32> to vector<1x4x16x64xf32>
      tpu.vector_store %arg7[%c0_42, %c0_43, %c0_44, %c0_45], %41 {strides = array<i32>} : memref<1x4x16x64xf32, #tpu.memory_space<vmem>>, vector<1x4x16x64xf32>,
    } else {
    }
    return
  }
  func.func @transform_0(%arg0: i32, %arg1: i32, %arg2: i32, %arg3: i32) -> (i32, i32, i32, i32, i32) {
    %c0_i32 = arith.constant 0 : i32
    %c0_i32_0 = arith.constant 0 : i32
    %c0_i32_1 = arith.constant 0 : i32
    return %arg0, %c0_i32, %arg1, %c0_i32_0, %arg2 : i32, i32, i32, i32, i32
  }
  func.func @transform_1(%arg0: i32, %arg1: i32, %arg2: i32, %arg3: i32) -> (i32, i32, i32, i32, i32) {
    %c1_i32 = arith.constant 1 : i32
    %c0_i32 = arith.constant 0 : i32
    %c0_i32_0 = arith.constant 0 : i32
    return %arg0, %c1_i32, %arg1, %c0_i32, %arg3 : i32, i32, i32, i32, i32
  }
  func.func @transform_2(%arg0: i32, %arg1: i32, %arg2: i32, %arg3: i32) -> (i32, i32, i32, i32, i32) {
    %c2_i32 = arith.constant 2 : i32
    %c0_i32 = arith.constant 0 : i32
    %c0_i32_0 = arith.constant 0 : i32
    return %arg0, %c2_i32, %arg1, %c0_i32, %arg3 : i32, i32, i32, i32, i32
  }
  func.func @transform_3(%arg0: i32, %arg1: i32, %arg2: i32, %arg3: i32) -> (i32, i32, i32, i32) {
    %c0_i32 = arith.constant 0 : i32
    %c0_i32_0 = arith.constant 0 : i32
    return %arg0, %arg1, %c0_i32, %arg2 : i32, i32, i32, i32
  }
}

</mosaic_0001>

<llo_original>
// kernel: tpu_custom_call.1
$region0: #{tpu_custom_call.1}
  #allocation0 [shape = 'u32[]', space=smem, size = 0x4, offset = 0x4, fixed_abs, tag = 'smem constant byte address 0x4 - core index']
  #allocation1 [shape = 'u32[144,128]{1,0:T(1,128)}', space=vmem, size = 0x12000, scoped, tag = 'internal scratch']
  #allocation2 [shape = 'f32[4,16,64]{2,1,0:T(8,128)}', space=vmem, size = 0x8000, scoped, tag = 'scratch operand']
  #allocation3 [shape = 'f32[4,1,64]{2,1,0:T(1,128)}', space=vmem, size = 0x800, scoped, tag = 'scratch operand']
  #allocation4 [shape = 'f32[4,1,64]{2,1,0:T(1,128)}', space=vmem, size = 0x800, scoped, tag = 'scratch operand']
  #allocation5 [shape = 'f32[4,16,64]{2,1,0:T(8,128)}', space=vmem, size = 0x8000, scoped, tag = 'scratch operand']
  %s0 = inlined_call_operand.hbm [shape: f32[2,3,4,16,64], index: 0, kind: input, shape index: {}]
  %s1 = inlined_call_operand.hbm [shape: f32[2,3,4,16,64], index: 1, kind: input, shape index: {}]
  %s2 = inlined_call_operand.hbm [shape: f32[2,3,4,16,64], index: 2, kind: input, shape index: {}]
  %s3 = inlined_call_operand.hbm [shape: f32[2,4,16,64], index: 3, kind: output, shape index: {}]
  %s4 = sld [smem:[#allocation0]]
  $region65: #{tpu_custom_call.1} parent=0
    _
  %s6 = ssub.s32 1, %s4
  %s7 = scalar_select 0, %s6, %s4
  $region1: #{tpu_custom_call.1} parent=0
    #allocation6 [shape = 'u8[65536]{0}', space=vmem, size = 0x10000, scoped, tag = 'input window, operand 0']
    #allocation7 [shape = 's32[2]{0}', space=sflag, size = 0x8, scoped, tag = 'scoped memory for tpu_custom_call.1']
    #allocation8 [shape = 's32[2]{0}', space=sflag, size = 0x8, scoped, tag = 'scoped memory for tpu_custom_call.1']
    #allocation9 [shape = 'u8[65536]{0}', space=vmem, size = 0x10000, scoped, tag = 'input window, operand 1']
    #allocation10 [shape = 's32[2]{0}', space=sflag, size = 0x8, scoped, tag = 'scoped memory for tpu_custom_call.1']
    #allocation11 [shape = 'u8[65536]{0}', space=vmem, size = 0x10000, scoped, tag = 'input window, operand 2']
    #allocation12 [shape = 'u8[65536]{0}', space=vmem, size = 0x10000, scoped, tag = 'output window, operand 0']
    %8 = vsyncpa [#allocation7], 0
    %s9 = scalar_lea.sflag [#allocation7], 1
    %10 = vsyncpa %s9, 0
    %11 = vsyncpa [#allocation10], 0
    %s12 = scalar_lea.sflag [#allocation10], 1
    %13 = vsyncpa %s12, 0
    %14 = vsyncpa [#allocation8], 0
    %s15 = scalar_lea.sflag [#allocation8], 1
    %16 = vsyncpa %s15, 0
    loop: start=0, step=1, limit=4
    $region2: #{tpu_custom_call.1} parent=1 // loop_pre_header
      _
    $region3: #{tpu_custom_call.1} parent=1 // loop_header
      %s18 = sphi 0, %s22
      %p19 = scmp.ge.s32.totalorder %s18, 4
      %s25 = sphi 0, %s51
      %s26 = sphi 0, %s47
      %s27 = sphi 0, %s43
      %s28 = sphi 0, %s39
      %s29 = sphi 0, %s25
      %s30 = sphi 0, %s26
      %s31 = sphi 0, %s27
      %s32 = sphi 0, %s28
      %s33 = sphi 0, %s29
      %s34 = sphi 0, %s30
      %s35 = sphi 0, %s31
      %s36 = sphi 0, %s32
      %s58 = sphi 0, %s60
      %s61 = sphi 0, %s58
      %s62 = sphi 0, %s61
      %s78 = sphi 0, %s62
      %s88 = sphi 0, %s90
      %s91 = sphi 0, %s88
      %s92 = sphi 0, %s91
      %s108 = sphi 0, %s92
      %s118 = sphi 0, %s120
      %s121 = sphi 0, %s118
      %s122 = sphi 0, %s121
      %s138 = sphi 0, %s122
      %s148 = sphi 0, %s150
      %s151 = sphi 0, %s148
      %s152 = sphi 0, %s151
      %s168 = sphi 0, %s152
    $region4: #{tpu_custom_call.1} parent=1 // loop_header_branch
      %21 = sbr.rel (%p19) target = $region8
    $region5: #{tpu_custom_call.1} parent=1 // loop_body
      %s23 = ssub.s32 %s18, 1
      %s24 = ssub.s32 %s18, 2
      %s37 = sadd.s32 1, %s28
      %p38 = scmp.ge.s32.totalorder %s37, 1
      %s39 = scalar_select %p38, 0, %s37
      %s40 = sadd.s32 1, %s27
      %s41 = scalar_select %p38, %s40, %s27
      %p42 = scmp.ge.s32.totalorder %s41, 1
      %s43 = scalar_select %p42, 0, %s41
      %s44 = sadd.s32 1, %s26
      %s45 = scalar_select %p42, %s44, %s26
      %p46 = scmp.ge.s32.totalorder %s45, 1
      %s47 = scalar_select %p46, 0, %s45
      %s48 = sadd.s32 1, %s25
      %s49 = scalar_select %p46, %s48, %s25
      %p50 = scmp.ge.s32.totalorder %s49, 2
      %s51 = scalar_select %p50, 0, %s49
      %s52 = ssub.s32 %s25, %s51
      %s53 = ssub.s32 %s26, %s47
      %s54 = sor.u32 %s52, %s53
      %s55 = ssub.s32 %s27, %s43
      %s56 = sor.u32 %s54, %s55
      %p57 = scmp.eq.s32.totalorder %s56, 0
      %s59 = sadd.s32 %s58, 1
      %s60 = scalar_select %p57, %s58, %s59
      %p63 = pneg %p57
      %p64 = scmp.eq.s32.totalorder %s18, 1
      %p65 = por %p63, %p64
      %p66 = scmp.ne.s32.totalorder %s58, %s61
      %p67 = scmp.eq.s32.totalorder %s18, 0
      %p68 = por %p66, %p67
      %p69 = scmp.ne.s32.totalorder %s58, %s61
      %p70 = scmp.eq.s32.totalorder %s23, 1
      %p71 = por %p69, %p70
      %p72 = scmp.ne.s32.totalorder %s61, %s62
      %p73 = scmp.eq.s32.totalorder %s23, 0
      %p74 = por %p72, %p73
      %p75 = scmp.ne.s32.totalorder %s61, %s62
      %p76 = scmp.eq.s32.totalorder %s24, 1
      %p77 = por %p75, %p76
      %p79 = scmp.ne.s32.totalorder %s62, %s78
      %p80 = scmp.eq.s32.totalorder %s24, 0
      %p81 = por %p79, %p80
      %s82 = ssub.s32 %s25, %s51
      %s83 = ssub.s32 %s26, %s47
      %s84 = sor.u32 %s82, %s83
      %s85 = ssub.s32 %s28, %s39
      %s86 = sor.u32 %s84, %s85
      %p87 = scmp.eq.s32.totalorder %s86, 0
      %s89 = sadd.s32 %s88, 1
      %s90 = scalar_select %p87, %s88, %s89
      %p93 = pneg %p87
      %p94 = scmp.eq.s32.totalorder %s18, 1
      %p95 = por %p93, %p94
      %p96 = scmp.ne.s32.totalorder %s88, %s91
      %p97 = scmp.eq.s32.totalorder %s18, 0
      %p98 = por %p96, %p97
      %p99 = scmp.ne.s32.totalorder %s88, %s91
      %p100 = scmp.eq.s32.totalorder %s23, 1
      %p101 = por %p99, %p100
      %p102 = scmp.ne.s32.totalorder %s91, %s92
      %p103 = scmp.eq.s32.totalorder %s23, 0
      %p104 = por %p102, %p103
      %p105 = scmp.ne.s32.totalorder %s91, %s92
      %p106 = scmp.eq.s32.totalorder %s24, 1
      %p107 = por %p105, %p106
      %p109 = scmp.ne.s32.totalorder %s92, %s108
      %p110 = scmp.eq.s32.totalorder %s24, 0
      %p111 = por %p109, %p110
      %s112 = ssub.s32 %s25, %s51
      %s113 = ssub.s32 %s26, %s47
      %s114 = sor.u32 %s112, %s113
      %s115 = ssub.s32 %s28, %s39
      %s116 = sor.u32 %s114, %s115
      %p117 = scmp.eq.s32.totalorder %s116, 0
      %s119 = sadd.s32 %s118, 1
      %s120 = scalar_select %p117, %s118, %s119
      %p123 = pneg %p117
      %p124 = scmp.eq.s32.totalorder %s18, 1
      %p125 = por %p123, %p124
      %p126 = scmp.ne.s32.totalorder %s118, %s121
      %p127 = scmp.eq.s32.totalorder %s18, 0
      %p128 = por %p126, %p127
      %p129 = scmp.ne.s32.totalorder %s118, %s121
      %p130 = scmp.eq.s32.totalorder %s23, 1
      %p131 = por %p129, %p130
      %p132 = scmp.ne.s32.totalorder %s121, %s122
      %p133 = scmp.eq.s32.totalorder %s23, 0
      %p134 = por %p132, %p133
      %p135 = scmp.ne.s32.totalorder %s121, %s122
      %p136 = scmp.eq.s32.totalorder %s24, 1
      %p137 = por %p135, %p136
      %p139 = scmp.ne.s32.totalorder %s122, %s138
      %p140 = scmp.eq.s32.totalorder %s24, 0
      %p141 = por %p139, %p140
      %s142 = ssub.s32 %s25, %s51
      %s143 = ssub.s32 %s26, %s47
      %s144 = sor.u32 %s142, %s143
      %s145 = ssub.s32 %s27, %s43
      %s146 = sor.u32 %s144, %s145
      %p147 = scmp.eq.s32.totalorder %s146, 0
      %s149 = sadd.s32 %s148, 1
      %s150 = scalar_select %p147, %s148, %s149
      %p153 = pneg %p147
      %p154 = scmp.eq.s32.totalorder %s18, 1
      %p155 = por %p153, %p154
      %p156 = scmp.ne.s32.totalorder %s148, %s151
      %p157 = scmp.eq.s32.totalorder %s18, 0
      %p158 = por %p156, %p157
      %p159 = scmp.ne.s32.totalorder %s148, %s151
      %p160 = scmp.eq.s32.totalorder %s23, 1
      %p161 = por %p159, %p160
      %p162 = scmp.ne.s32.totalorder %s151, %s152
      %p163 = scmp.eq.s32.totalorder %s23, 0
      %p164 = por %p162, %p163
      %p165 = scmp.ne.s32.totalorder %s151, %s152
      %p166 = scmp.eq.s32.totalorder %s24, 1
      %p167 = por %p165, %p166
      %p169 = scmp.ne.s32.totalorder %s152, %s168
      %p170 = scmp.eq.s32.totalorder %s24, 0
      %p171 = por %p169, %p170
      %p172 = scmp.le.s32.totalorder 1, %s18
      %p173 = scmp.lt.s32.totalorder %s18, 3
      %p174 = pnand %p172, %p173
      %p175 = pneg %p174
      // Predicated region
      $region9: #{tpu_custom_call.1} parent=5 // pred_check
        _
      $region10: #{tpu_custom_call.1} parent=5 // pred_check_branch
        %177 = sbr.rel (%p174) target = $region12
      $region11: #{tpu_custom_call.1} parent=5 // pred_region
        %s178 = ssub.s32 %s18, 1
      $region12: #{tpu_custom_call.1} parent=5 // pred_fallthru
        _
      %p179 = scmp.lt.s32.totalorder %s18, 2
      // Predicated region
      $region13: #{tpu_custom_call.1} parent=5 // pred_check
        %p180 = pneg %p179
      $region14: #{tpu_custom_call.1} parent=5 // pred_check_branch
        %182 = sbr.rel (%p180) target = $region16
      $region15: #{tpu_custom_call.1} parent=5 // pred_region
        // Predicated region
        $region17: #{tpu_custom_call.1} parent=15 // pred_check
          %p183 = pneg %p68
        $region18: #{tpu_custom_call.1} parent=15 // pred_check_branch
          %185 = sbr.rel (%p183) target = $region20
        $region19: #{tpu_custom_call.1} parent=15 // pred_region
          %s186 = sand.u32 %s58, 1
          %s187 = scalar_lea.sflag [#allocation7], %s186
          %s188 = sand.u32 %s58, 1
          %s189 = smul.addr %s188, 64
          %s190 = scalar_lea.vmem [#allocation6], %s189
          %s191 = smul.u32 4, %s26
          %s193 = ssub.s32 1024, 1024
          %194 = vsyncadd %s187, %s193
          %s195 = smul.addr %s191, 2
          %s196 = sadd.s32 %s27, %s195
          %s197 = smul.addr %s25, 24
          %s198 = sadd.s32 %s196, %s197
          %s199 = smul.addr %s198, 128
          %s200 = scalar_lea.hbm %s0, %s199
          %s201 = sshll.u32 %s190, 4
          %s202 = int_to_ptr.vmem [resolvable:$true] %s201
          %207 = dma.hbm_to_vmem [thread:$0]  %s200, 1024, %s202, %s187, 128, 128, 8
        $region20: #{tpu_custom_call.1} parent=15 // pred_fallthru
          _
        // Predicated region
        $region21: #{tpu_custom_call.1} parent=15 // pred_check
          %p208 = pneg %p98
        $region22: #{tpu_custom_call.1} parent=15 // pred_check_branch
          %210 = sbr.rel (%p208) target = $region24
        $region23: #{tpu_custom_call.1} parent=15 // pred_region
          %s211 = sand.u32 %s18, 1
          %s212 = scalar_lea.sflag [#allocation10], %s211
          %s213 = sand.u32 %s88, 1
          %s214 = smul.addr %s213, 64
          %s215 = scalar_lea.vmem [#allocation9], %s214
          %s216 = smul.u32 4, %s26
          %s218 = ssub.s32 1024, 1024
          %219 = vsyncadd %s212, %s218
          %s220 = smul.addr %s216, 2
          %s221 = sadd.s32 %s28, %s220
          %s222 = sadd.s32 %s221, 8
          %s223 = smul.addr %s25, 24
          %s224 = sadd.s32 %s222, %s223
          %s225 = smul.addr %s224, 128
          %s226 = scalar_lea.hbm %s1, %s225
          %s227 = sshll.u32 %s215, 4
          %s228 = int_to_ptr.vmem [resolvable:$true] %s227
          %233 = dma.hbm_to_vmem [thread:$0]  %s226, 1024, %s228, %s212, 128, 128, 8
        $region24: #{tpu_custom_call.1} parent=15 // pred_fallthru
          _
        // Predicated region
        $region25: #{tpu_custom_call.1} parent=15 // pred_check
          %p234 = pneg %p128
        $region26: #{tpu_custom_call.1} parent=15 // pred_check_branch
          %236 = sbr.rel (%p234) target = $region28
        $region27: #{tpu_custom_call.1} parent=15 // pred_region
          %s237 = sand.u32 %s18, 1
          %s238 = scalar_lea.sflag [#allocation10], %s237
          %s239 = sand.u32 %s118, 1
          %s240 = smul.addr %s239, 64
          %s241 = scalar_lea.vmem [#allocation11], %s240
          %s242 = smul.u32 4, %s26
          %s244 = ssub.s32 1024, 1024
          %245 = vsyncadd %s238, %s244
          %s246 = smul.addr %s242, 2
          %s247 = sadd.s32 %s28, %s246
          %s248 = sadd.s32 %s247, 16
          %s249 = smul.addr %s25, 24
          %s250 = sadd.s32 %s248, %s249
          %s251 = smul.addr %s250, 128
          %s252 = scalar_lea.hbm %s2, %s251
          %s253 = sshll.u32 %s241, 4
          %s254 = int_to_ptr.vmem [resolvable:$true] %s253
          %259 = dma.hbm_to_vmem [thread:$0]  %s252, 1024, %s254, %s238, 128, 128, 8
        $region28: #{tpu_custom_call.1} parent=15 // pred_fallthru
          _
      $region16: #{tpu_custom_call.1} parent=5 // pred_fallthru
        _
      %p260 = scmp.le.s32.totalorder 1, %s18
      %p261 = scmp.lt.s32.totalorder %s18, 3
      %p262 = pnand %p260, %p261
      %p263 = pneg %p262
      // Predicated region
      $region29: #{tpu_custom_call.1} parent=5 // pred_check
        _
      $region30: #{tpu_custom_call.1} parent=5 // pred_check_branch
        %265 = sbr.rel (%p262) target = $region32
      $region31: #{tpu_custom_call.1} parent=5 // pred_region
        %s266 = ssub.s32 %s18, 1
        %s267 = sand.u32 %s61, 1
        %s268 = scalar_lea.sflag [#allocation7], %s267
        %s269 = sand.u32 %s61, 1
        %s270 = smul.addr %s269, 64
        %s271 = scalar_lea.vmem [#allocation6], %s270
        // Predicated region
        $region33: #{tpu_custom_call.1} parent=31 // pred_check
          %p272 = pneg %p74
        $region34: #{tpu_custom_call.1} parent=31 // pred_check_branch
          %274 = sbr.rel (%p272) target = $region36
        $region35: #{tpu_custom_call.1} parent=31 // pred_region
          %275 = dma.done %s268, 1024
        $region36: #{tpu_custom_call.1} parent=31 // pred_fallthru
          _
        %s276 = sand.u32 %s23, 1
        %s277 = scalar_lea.sflag [#allocation10], %s276
        %s278 = sand.u32 %s91, 1
        %s279 = smul.addr %s278, 64
        %s280 = scalar_lea.vmem [#allocation9], %s279
        // Predicated region
        $region37: #{tpu_custom_call.1} parent=31 // pred_check
          %p281 = pneg %p104
        $region38: #{tpu_custom_call.1} parent=31 // pred_check_branch
          %283 = sbr.rel (%p281) target = $region40
        $region39: #{tpu_custom_call.1} parent=31 // pred_region
          %284 = dma.done %s277, 1024
        $region40: #{tpu_custom_call.1} parent=31 // pred_fallthru
          _
        %s285 = sand.u32 %s23, 1
        %s286 = scalar_lea.sflag [#allocation10], %s285
        %s287 = sand.u32 %s121, 1
        %s288 = smul.addr %s287, 64
        %s289 = scalar_lea.vmem [#allocation11], %s288
        // Predicated region
        $region41: #{tpu_custom_call.1} parent=31 // pred_check
          %p290 = pneg %p134
        $region42: #{tpu_custom_call.1} parent=31 // pred_check_branch
          %292 = sbr.rel (%p290) target = $region44
        $region43: #{tpu_custom_call.1} parent=31 // pred_region
          %293 = dma.done %s286, 1024
        $region44: #{tpu_custom_call.1} parent=31 // pred_fallthru
          _
        %s294 = sand.u32 %s61, 1
        %s295 = scalar_lea.sflag [#allocation7], %s294
        %s296 = sand.u32 %s61, 1
        %s297 = smul.addr %s296, 64
        %s298 = scalar_lea.vmem [#allocation6], %s297
        %p299 = pneg %p74
        %p300 = pneg %p71
        %s301 = sand.u32 %s23, 1
        %s302 = scalar_lea.sflag [#allocation10], %s301
        %s303 = sand.u32 %s91, 1
        %s304 = smul.addr %s303, 64
        %s305 = scalar_lea.vmem [#allocation9], %s304
        %p306 = pneg %p104
        %p307 = pneg %p101
        %s308 = sand.u32 %s23, 1
        %s309 = scalar_lea.sflag [#allocation10], %s308
        %s310 = sand.u32 %s121, 1
        %s311 = smul.addr %s310, 64
        %s312 = scalar_lea.vmem [#allocation11], %s311
        %p313 = pneg %p134
        %p314 = pneg %p131
        %p315 = pneg %p164
        %p316 = pneg %p161
        %s317 = sand.u32 %s151, 1
        %s318 = scalar_lea.sflag [#allocation8], %s317
        %s319 = sand.u32 %s151, 1
        %s320 = smul.addr %s319, 64
        %s321 = scalar_lea.vmem [#allocation12], %s320
        %s322 = smul.u32 4, %s30
        %s323 = smul.u32 4, %s30
        %s324 = smul.u32 4, %s30
        %s325 = smul.u32 4, %s30
        %p326 = scmp.eq.s32.totalorder %s32, 0
        // Predicated region
        $region45: #{tpu_custom_call.1} parent=31 // pred_check
          %p327 = pneg %p326
        $region46: #{tpu_custom_call.1} parent=31 // pred_check_branch
          %329 = sbr.rel (%p327) target = $region48
        $region47: #{tpu_custom_call.1} parent=31 // pred_region
          %v330 = vld [vmem:[%s271] sm:$0xff]
          %v331 = vld [vmem:[%s271 + $0x8] sm:$0xff]
          %v332 = vld [vmem:[%s271 + $0x10] sm:$0xff]
          %v333 = vld [vmem:[%s271 + $0x18] sm:$0xff]
          %v334 = vld [vmem:[%s271 + $0x20] sm:$0xff]
          %v335 = vld [vmem:[%s271 + $0x28] sm:$0xff]
          %v336 = vld [vmem:[%s271 + $0x30] sm:$0xff]
          %v337 = vld [vmem:[%s271 + $0x38] sm:$0xff]
          %v338 = vmul.f32 %v330, 0.25
          %v339 = vmul.f32 %v331, 0.25
          %v340 = vmul.f32 %v332, 0.25
          %v341 = vmul.f32 %v333, 0.25
          %v342 = vmul.f32 %v334, 0.25
          %v343 = vmul.f32 %v335, 0.25
          %v344 = vmul.f32 %v336, 0.25
          %v345 = vmul.f32 %v337, 0.25
          %vm346 = vcmask 523264
          %347 = vst.msk [vmem:[#allocation2] sm:$0xff] %vm346, %v338
          %348 = vst.msk [vmem:[#allocation2 + $0x8] sm:$0xff] %vm346, %v339
          %349 = vst.msk [vmem:[#allocation2 + $0x10] sm:$0xff] %vm346, %v340
          %350 = vst.msk [vmem:[#allocation2 + $0x18] sm:$0xff] %vm346, %v341
          %351 = vst.msk [vmem:[#allocation2 + $0x20] sm:$0xff] %vm346, %v342
          %352 = vst.msk [vmem:[#allocation2 + $0x28] sm:$0xff] %vm346, %v343
          %353 = vst.msk [vmem:[#allocation2 + $0x30] sm:$0xff] %vm346, %v344
          %354 = vst.msk [vmem:[#allocation2 + $0x38] sm:$0xff] %vm346, %v345
          %vm355 = vcmask 516096
          %356 = vst.msk [vmem:[#allocation3] sm:$0x1] %vm355, -inf
          %357 = vst.msk [vmem:[#allocation3 + $0x1] sm:$0x1] %vm355, -inf
          %358 = vst.msk [vmem:[#allocation3 + $0x2] sm:$0x1] %vm355, -inf
          %359 = vst.msk [vmem:[#allocation3 + $0x3] sm:$0x1] %vm355, -inf
          %360 = vst.msk [vmem:[#allocation4] sm:$0x1] %vm355, 0.0
          %361 = vst.msk [vmem:[#allocation4 + $0x1] sm:$0x1] %vm355, 0.0
          %362 = vst.msk [vmem:[#allocation4 + $0x2] sm:$0x1] %vm355, 0.0
          %363 = vst.msk [vmem:[#allocation4 + $0x3] sm:$0x1] %vm355, 0.0
          %364 = vst.msk [vmem:[#allocation5] sm:$0xff] %vm346, 0.0
          %365 = vst.msk [vmem:[#allocation5 + $0x8] sm:$0xff] %vm346, 0.0
          %366 = vst.msk [vmem:[#allocation5 + $0x10] sm:$0xff] %vm346, 0.0
          %367 = vst.msk [vmem:[#allocation5 + $0x18] sm:$0xff] %vm346, 0.0
          %368 = vst.msk [vmem:[#allocation5 + $0x20] sm:$0xff] %vm346, 0.0
          %369 = vst.msk [vmem:[#allocation5 + $0x28] sm:$0xff] %vm346, 0.0
          %370 = vst.msk [vmem:[#allocation5 + $0x30] sm:$0xff] %vm346, 0.0
          %371 = vst.msk [vmem:[#allocation5 + $0x38] sm:$0xff] %vm346, 0.0
        $region48: #{tpu_custom_call.1} parent=31 // pred_fallthru
          _
        %v372 = vld [vmem:[#allocation2] sm:$0xff]
        %v373 = vld [vmem:[#allocation2 + $0x8] sm:$0xff]
        %v374 = vld [vmem:[#allocation2 + $0x10] sm:$0xff]
        %v375 = vld [vmem:[#allocation2 + $0x18] sm:$0xff]
        %v376 = vld [vmem:[#allocation2 + $0x20] sm:$0xff]
        %v377 = vld [vmem:[#allocation2 + $0x28] sm:$0xff]
        %v378 = vld [vmem:[#allocation2 + $0x30] sm:$0xff]
        %v379 = vld [vmem:[#allocation2 + $0x38] sm:$0xff]
        %v380 = vld [vmem:[%s280] sm:$0xff]
        %v381 = vld [vmem:[%s280 + $0x8] sm:$0xff]
        %v382 = vld [vmem:[%s280 + $0x10] sm:$0xff]
        %v383 = vld [vmem:[%s280 + $0x18] sm:$0xff]
        %v384 = vld [vmem:[%s280 + $0x20] sm:$0xff]
        %v385 = vld [vmem:[%s280 + $0x28] sm:$0xff]
        %v386 = vld [vmem:[%s280 + $0x30] sm:$0xff]
        %v387 = vld [vmem:[%s280 + $0x38] sm:$0xff]
        %v388 = vld [vmem:[%s289] sm:$0xff]
        %v389 = vld [vmem:[%s289 + $0x8] sm:$0xff]
        %v390 = vld [vmem:[%s289 + $0x10] sm:$0xff]
        %v391 = vld [vmem:[%s289 + $0x18] sm:$0xff]
        %v392 = vld [vmem:[%s289 + $0x20] sm:$0xff]
        %v393 = vld [vmem:[%s289 + $0x28] sm:$0xff]
        %v394 = vld [vmem:[%s289 + $0x30] sm:$0xff]
        %v395 = vld [vmem:[%s289 + $0x38] sm:$0xff]
        %396 = vxpose.xlu0.b32.start [1/16] %v380, 128
        %397 = vxpose.xlu0.b32.cont [2/16] %v381, 128
        %398 = vxpose.xlu0.b32.cont [3/16] 0.0, 128
        %399 = vxpose.xlu0.b32.cont [4/16] 0.0, 128
        %400 = vxpose.xlu0.b32.cont [5/16] 0.0, 128
        %401 = vxpose.xlu0.b32.cont [6/16] 0.0, 128
        %402 = vxpose.xlu0.b32.cont [7/16] 0.0, 128
        %403 = vxpose.xlu0.b32.cont [8/16] 0.0, 128
        %404 = vxpose.xlu0.b32.cont [9/16] 0.0, 128
        %405 = vxpose.xlu0.b32.cont [10/16] 0.0, 128
        %406 = vxpose.xlu0.b32.cont [11/16] 0.0, 128
        %407 = vxpose.xlu0.b32.cont [12/16] 0.0, 128
        %408 = vxpose.xlu0.b32.cont [13/16] 0.0, 128
        %409 = vxpose.xlu0.b32.cont [14/16] 0.0, 128
        %410 = vxpose.xlu0.b32.cont [15/16] 0.0, 128
        %411 = vxpose.xlu0.b32.end [16/16] 0.0, 128
        %v412 = vpop.trf.xlu0
        %v413 = vpop.trf.xlu0
        %v414 = vpop.trf.xlu0
        %v415 = vpop.trf.xlu0
        %v416 = vpop.trf.xlu0
        %v417 = vpop.trf.xlu0
        %v418 = vpop.trf.xlu0
        %v419 = vpop.trf.xlu0
        %v420 = vpop.trf.xlu0
        %v421 = vpop.trf.xlu0
        %v422 = vpop.trf.xlu0
        %v423 = vpop.trf.xlu0
        %v424 = vpop.trf.xlu0
        %v425 = vpop.trf.xlu0
        %v426 = vpop.trf.xlu0
        %v427 = vpop.trf.xlu0
        %vm428 = vcmask 130048
        %v430 = vsel %vm428, %v412, 0
        %v433 = vsel %vm428, %v413, 0
        %v436 = vsel %vm428, %v414, 0
        %v439 = vsel %vm428, %v415, 0
        %v442 = vsel %vm428, %v416, 0
        %v445 = vsel %vm428, %v417, 0
        %v448 = vsel %vm428, %v418, 0
        %v451 = vsel %vm428, %v419, 0
        %453 = vmatprep.subr.mxu0 0.0
        %454 = vmatpush1.msra.mxu0 0.0
        %455 = vmatprep.subr.mxu0 0.0
        %456 = vmatpush1.msra.mxu0 0.0
        %457 = vmatprep.subr.mxu0 0.0
        %458 = vmatpush1.msra.mxu0 0.0
        %459 = vmatprep.subr.mxu0 0.0
        %460 = vmatpush1.msra.mxu0 0.0
        %461 = vmatprep.subr.mxu0 0.0
        %462 = vmatpush1.msra.mxu0 0.0
        %463 = vmatprep.subr.mxu0 0.0
        %464 = vmatpush1.msra.mxu0 0.0
        %465 = vmatprep.subr.mxu0 0.0
        %466 = vmatpush1.msra.mxu0 0.0
        %467 = vmatprep.subr.mxu0 0.0
        %468 = vmatpush1.msra.mxu0 0.0
        %469 = vmatprep.subr.mxu0 0.0
        %470 = vmatpush1.msra.mxu0 0.0
        %471 = vmatprep.subr.mxu0 0.0
        %472 = vmatpush1.msra.mxu0 0.0
        %473 = vmatprep.subr.mxu0 0.0
        %474 = vmatpush1.msra.mxu0 0.0
        %475 = vmatprep.subr.mxu0 0.0
        %476 = vmatpush1.msra.mxu0 0.0
        %477 = vmatprep.subr.mxu0 0.0
        %478 = vmatpush1.msra.mxu0 0.0
        %479 = vmatprep.subr.mxu0 0.0
        %480 = vmatpush1.msra.mxu0 0.0
        %481 = vmatprep.subr.mxu0 0.0
        %482 = vmatpush1.msra.mxu0 %v373
        %483 = vmatprep.subr.mxu0 0.0
        %484 = vmatpush1.msra.mxu0 %v372
        %485 = vmatprep.subr.mxu0 0.0
        %486 = vmatpush2.msra.mxu0 0.0
        %487 = vmatprep.subr.mxu0 0.0
        %488 = vmatpush2.msra.mxu0 0.0
        %489 = vmatprep.subr.mxu0 0.0
        %490 = vmatpush2.msra.mxu0 0.0
        %491 = vmatprep.subr.mxu0 0.0
        %492 = vmatpush2.msra.mxu0 0.0
        %493 = vmatprep.subr.mxu0 0.0
        %494 = vmatpush2.msra.mxu0 0.0
        %495 = vmatprep.subr.mxu0 0.0
        %496 = vmatpush2.msra.mxu0 0.0
        %497 = vmatprep.subr.mxu0 0.0
        %498 = vmatpush2.msra.mxu0 0.0
        %499 = vmatprep.subr.mxu0 0.0
        %500 = vmatpush2.msra.mxu0 0.0
        %501 = vmatprep.subr.mxu0 0.0
        %502 = vmatpush2.msra.mxu0 0.0
        %503 = vmatprep.subr.mxu0 0.0
        %504 = vmatpush2.msra.mxu0 0.0
        %505 = vmatprep.subr.mxu0 0.0
        %506 = vmatpush2.msra.mxu0 0.0
        %507 = vmatprep.subr.mxu0 0.0
        %508 = vmatpush2.msra.mxu0 0.0
        %509 = vmatprep.subr.mxu0 0.0
        %510 = vmatpush2.msra.mxu0 0.0
        %511 = vmatprep.subr.mxu0 0.0
        %512 = vmatpush2.msra.mxu0 0.0
        %513 = vmatprep.subr.mxu0 0.0
        %514 = vmatpush2.msra.mxu0 0.0
        %515 = vmatprep.subr.mxu0 0.0
        %516 = vmatpush2.msra.mxu0 0.0
        %517 = vmatprep.mubr.f32.mxu0 0.0
        %518 = vmatmul.mubr.f32.gmra.mxu0 %v430
        %v519 = vpop.f32.mrf.mxu0
        %v520 = vadd.f32 0.0, %v519
        %v521 = vpop.f32.mrf.mxu0
        %522 = vmatprep.mubr.f32.mxu0 0.0
        %523 = vmatmul.mubr.f32.gmra.mxu0 %v433
        %v524 = vpop.f32.mrf.mxu0
        %v525 = vadd.f32 0.0, %v524
        %v526 = vpop.f32.mrf.mxu0
        %527 = vmatprep.mubr.f32.mxu0 0.0
        %528 = vmatmul.mubr.f32.gmra.mxu0 %v436
        %v529 = vpop.f32.mrf.mxu0
        %v530 = vadd.f32 0.0, %v529
        %v531 = vpop.f32.mrf.mxu0
        %532 = vmatprep.mubr.f32.mxu0 0.0
        %533 = vmatmul.mubr.f32.gmra.mxu0 %v439
        %v534 = vpop.f32.mrf.mxu0
        %v535 = vadd.f32 0.0, %v534
        %v536 = vpop.f32.mrf.mxu0
        %537 = vmatprep.mubr.f32.mxu0 0.0
        %538 = vmatmul.mubr.f32.gmra.mxu0 %v442
        %v539 = vpop.f32.mrf.mxu0
        %v540 = vadd.f32 0.0, %v539
        %v541 = vpop.f32.mrf.mxu0
        %542 = vmatprep.mubr.f32.mxu0 0.0
        %543 = vmatmul.mubr.f32.gmra.mxu0 %v445
        %v544 = vpop.f32.mrf.mxu0
        %v545 = vadd.f32 0.0, %v544
        %v546 = vpop.f32.mrf.mxu0
        %547 = vmatprep.mubr.f32.mxu0 0.0
        %548 = vmatmul.mubr.f32.gmra.mxu0 %v448
        %v549 = vpop.f32.mrf.mxu0
        %v550 = vadd.f32 0.0, %v549
        %v551 = vpop.f32.mrf.mxu0
        %552 = vmatprep.mubr.f32.mxu0 0.0
        %553 = vmatmul.mubr.f32.gmra.mxu0 %v451
        %v554 = vpop.f32.mrf.mxu0
        %v555 = vadd.f32 0.0, %v554
        %v556 = vpop.f32.mrf.mxu0
        %557 = vdwg.mxu0
        %558 = vxpose.xlu0.b32.start [1/16] %v382, 128
        %559 = vxpose.xlu0.b32.cont [2/16] %v383, 128
        %560 = vxpose.xlu0.b32.cont [3/16] 0.0, 128
        %561 = vxpose.xlu0.b32.cont [4/16] 0.0, 128
        %562 = vxpose.xlu0.b32.cont [5/16] 0.0, 128
        %563 = vxpose.xlu0.b32.cont [6/16] 0.0, 128
        %564 = vxpose.xlu0.b32.cont [7/16] 0.0, 128
        %565 = vxpose.xlu0.b32.cont [8/16] 0.0, 128
        %566 = vxpose.xlu0.b32.cont [9/16] 0.0, 128
        %567 = vxpose.xlu0.b32.cont [10/16] 0.0, 128
        %568 = vxpose.xlu0.b32.cont [11/16] 0.0, 128
        %569 = vxpose.xlu0.b32.cont [12/16] 0.0, 128
        %570 = vxpose.xlu0.b32.cont [13/16] 0.0, 128
        %571 = vxpose.xlu0.b32.cont [14/16] 0.0, 128
        %572 = vxpose.xlu0.b32.cont [15/16] 0.0, 128
        %573 = vxpose.xlu0.b32.end [16/16] 0.0, 128
        %v574 = vpop.trf.xlu0
        %v575 = vpop.trf.xlu0
        %v576 = vpop.trf.xlu0
        %v577 = vpop.trf.xlu0
        %v578 = vpop.trf.xlu0
        %v579 = vpop.trf.xlu0
        %v580 = vpop.trf.xlu0
        %v581 = vpop.trf.xlu0
        %v582 = vpop.trf.xlu0
        %v583 = vpop.trf.xlu0
        %v584 = vpop.trf.xlu0
        %v585 = vpop.trf.xlu0
        %v586 = vpop.trf.xlu0
        %v587 = vpop.trf.xlu0
        %v588 = vpop.trf.xlu0
        %v589 = vpop.trf.xlu0
        %v591 = vsel %vm428, %v574, 0
        %v594 = vsel %vm428, %v575, 0
        %v597 = vsel %vm428, %v576, 0
        %v600 = vsel %vm428, %v577, 0
        %v603 = vsel %vm428, %v578, 0
        %v606 = vsel %vm428, %v579, 0
        %v609 = vsel %vm428, %v580, 0
        %v612 = vsel %vm428, %v581, 0
        %614 = vmatprep.subr.mxu0 0.0
        %615 = vmatpush1.msra.mxu0 0.0
        %616 = vmatprep.subr.mxu0 0.0
        %617 = vmatpush1.msra.mxu0 0.0
        %618 = vmatprep.subr.mxu0 0.0
        %619 = vmatpush1.msra.mxu0 0.0
        %620 = vmatprep.subr.mxu0 0.0
        %621 = vmatpush1.msra.mxu0 0.0
        %622 = vmatprep.subr.mxu0 0.0
        %623 = vmatpush1.msra.mxu0 0.0
        %624 = vmatprep.subr.mxu0 0.0
        %625 = vmatpush1.msra.mxu0 0.0
        %626 = vmatprep.subr.mxu0 0.0
        %627 = vmatpush1.msra.mxu0 0.0
        %628 = vmatprep.subr.mxu0 0.0
        %629 = vmatpush1.msra.mxu0 0.0
        %630 = vmatprep.subr.mxu0 0.0
        %631 = vmatpush1.msra.mxu0 0.0
        %632 = vmatprep.subr.mxu0 0.0
        %633 = vmatpush1.msra.mxu0 0.0
        %634 = vmatprep.subr.mxu0 0.0
        %635 = vmatpush1.msra.mxu0 0.0
        %636 = vmatprep.subr.mxu0 0.0
        %637 = vmatpush1.msra.mxu0 0.0
        %638 = vmatprep.subr.mxu0 0.0
        %639 = vmatpush1.msra.mxu0 0.0
        %640 = vmatprep.subr.mxu0 0.0
        %641 = vmatpush1.msra.mxu0 0.0
        %642 = vmatprep.subr.mxu0 0.0
        %643 = vmatpush1.msra.mxu0 %v375
        %644 = vmatprep.subr.mxu0 0.0
        %645 = vmatpush1.msra.mxu0 %v374
        %646 = vmatprep.subr.mxu0 0.0
        %647 = vmatpush2.msra.mxu0 0.0
        %648 = vmatprep.subr.mxu0 0.0
        %649 = vmatpush2.msra.mxu0 0.0
        %650 = vmatprep.subr.mxu0 0.0
        %651 = vmatpush2.msra.mxu0 0.0
        %652 = vmatprep.subr.mxu0 0.0
        %653 = vmatpush2.msra.mxu0 0.0
        %654 = vmatprep.subr.mxu0 0.0
        %655 = vmatpush2.msra.mxu0 0.0
        %656 = vmatprep.subr.mxu0 0.0
        %657 = vmatpush2.msra.mxu0 0.0
        %658 = vmatprep.subr.mxu0 0.0
        %659 = vmatpush2.msra.mxu0 0.0
        %660 = vmatprep.subr.mxu0 0.0
        %661 = vmatpush2.msra.mxu0 0.0
        %662 = vmatprep.subr.mxu0 0.0
        %663 = vmatpush2.msra.mxu0 0.0
        %664 = vmatprep.subr.mxu0 0.0
        %665 = vmatpush2.msra.mxu0 0.0
        %666 = vmatprep.subr.mxu0 0.0
        %667 = vmatpush2.msra.mxu0 0.0
        %668 = vmatprep.subr.mxu0 0.0
        %669 = vmatpush2.msra.mxu0 0.0
        %670 = vmatprep.subr.mxu0 0.0
        %671 = vmatpush2.msra.mxu0 0.0
        %672 = vmatprep.subr.mxu0 0.0
        %673 = vmatpush2.msra.mxu0 0.0
        %674 = vmatprep.subr.mxu0 0.0
        %675 = vmatpush2.msra.mxu0 0.0
        %676 = vmatprep.subr.mxu0 0.0
        %677 = vmatpush2.msra.mxu0 0.0
        %678 = vmatprep.mubr.f32.mxu0 0.0
        %679 = vmatmul.mubr.f32.gmra.mxu0 %v591
        %v680 = vpop.f32.mrf.mxu0
        %v681 = vadd.f32 0.0, %v680
        %v682 = vpop.f32.mrf.mxu0
        %683 = vmatprep.mubr.f32.mxu0 0.0
        %684 = vmatmul.mubr.f32.gmra.mxu0 %v594
        %v685 = vpop.f32.mrf.mxu0
        %v686 = vadd.f32 0.0, %v685
        %v687 = vpop.f32.mrf.mxu0
        %688 = vmatprep.mubr.f32.mxu0 0.0
        %689 = vmatmul.mubr.f32.gmra.mxu0 %v597
        %v690 = vpop.f32.mrf.mxu0
        %v691 = vadd.f32 0.0, %v690
        %v692 = vpop.f32.mrf.mxu0
        %693 = vmatprep.mubr.f32.mxu0 0.0
        %694 = vmatmul.mubr.f32.gmra.mxu0 %v600
        %v695 = vpop.f32.mrf.mxu0
        %v696 = vadd.f32 0.0, %v695
        %v697 = vpop.f32.mrf.mxu0
        %698 = vmatprep.mubr.f32.mxu0 0.0
        %699 = vmatmul.mubr.f32.gmra.mxu0 %v603
        %v700 = vpop.f32.mrf.mxu0
        %v701 = vadd.f32 0.0, %v700
        %v702 = vpop.f32.mrf.mxu0
        %703 = vmatprep.mubr.f32.mxu0 0.0
        %704 = vmatmul.mubr.f32.gmra.mxu0 %v606
        %v705 = vpop.f32.mrf.mxu0
        %v706 = vadd.f32 0.0, %v705
        %v707 = vpop.f32.mrf.mxu0
        %708 = vmatprep.mubr.f32.mxu0 0.0
        %709 = vmatmul.mubr.f32.gmra.mxu0 %v609
        %v710 = vpop.f32.mrf.mxu0
        %v711 = vadd.f32 0.0, %v710
        %v712 = vpop.f32.mrf.mxu0
        %713 = vmatprep.mubr.f32.mxu0 0.0
        %714 = vmatmul.mubr.f32.gmra.mxu0 %v612
        %v715 = vpop.f32.mrf.mxu0
        %v716 = vadd.f32 0.0, %v715
        %v717 = vpop.f32.mrf.mxu0
        %718 = vdwg.mxu0
        %719 = vxpose.xlu0.b32.start [1/16] %v384, 128
        %720 = vxpose.xlu0.b32.cont [2/16] %v385, 128
        %721 = vxpose.xlu0.b32.cont [3/16] 0.0, 128
        %722 = vxpose.xlu0.b32.cont [4/16] 0.0, 128
        %723 = vxpose.xlu0.b32.cont [5/16] 0.0, 128
        %724 = vxpose.xlu0.b32.cont [6/16] 0.0, 128
        %725 = vxpose.xlu0.b32.cont [7/16] 0.0, 128
        %726 = vxpose.xlu0.b32.cont [8/16] 0.0, 128
        %727 = vxpose.xlu0.b32.cont [9/16] 0.0, 128
        %728 = vxpose.xlu0.b32.cont [10/16] 0.0, 128
        %729 = vxpose.xlu0.b32.cont [11/16] 0.0, 128
        %730 = vxpose.xlu0.b32.cont [12/16] 0.0, 128
        %731 = vxpose.xlu0.b32.cont [13/16] 0.0, 128
        %732 = vxpose.xlu0.b32.cont [14/16] 0.0, 128
        %733 = vxpose.xlu0.b32.cont [15/16] 0.0, 128
        %734 = vxpose.xlu0.b32.end [16/16] 0.0, 128
        %v735 = vpop.trf.xlu0
        %v736 = vpop.trf.xlu0
        %v737 = vpop.trf.xlu0
        %v738 = vpop.trf.xlu0
        %v739 = vpop.trf.xlu0
        %v740 = vpop.trf.xlu0
        %v741 = vpop.trf.xlu0
        %v742 = vpop.trf.xlu0
        %v743 = vpop.trf.xlu0
        %v744 = vpop.trf.xlu0
        %v745 = vpop.trf.xlu0
        %v746 = vpop.trf.xlu0
        %v747 = vpop.trf.xlu0
        %v748 = vpop.trf.xlu0
        %v749 = vpop.trf.xlu0
        %v750 = vpop.trf.xlu0
        %v752 = vsel %vm428, %v735, 0
        %v755 = vsel %vm428, %v736, 0
        %v758 = vsel %vm428, %v737, 0
        %v761 = vsel %vm428, %v738, 0
        %v764 = vsel %vm428, %v739, 0
        %v767 = vsel %vm428, %v740, 0
        %v770 = vsel %vm428, %v741, 0
        %v773 = vsel %vm428, %v742, 0
        %775 = vmatprep.subr.mxu0 0.0
        %776 = vmatpush1.msra.mxu0 0.0
        %777 = vmatprep.subr.mxu0 0.0
        %778 = vmatpush1.msra.mxu0 0.0
        %779 = vmatprep.subr.mxu0 0.0
        %780 = vmatpush1.msra.mxu0 0.0
        %781 = vmatprep.subr.mxu0 0.0
        %782 = vmatpush1.msra.mxu0 0.0
        %783 = vmatprep.subr.mxu0 0.0
        %784 = vmatpush1.msra.mxu0 0.0
        %785 = vmatprep.subr.mxu0 0.0
        %786 = vmatpush1.msra.mxu0 0.0
        %787 = vmatprep.subr.mxu0 0.0
        %788 = vmatpush1.msra.mxu0 0.0
        %789 = vmatprep.subr.mxu0 0.0
        %790 = vmatpush1.msra.mxu0 0.0
        %791 = vmatprep.subr.mxu0 0.0
        %792 = vmatpush1.msra.mxu0 0.0
        %793 = vmatprep.subr.mxu0 0.0
        %794 = vmatpush1.msra.mxu0 0.0
        %795 = vmatprep.subr.mxu0 0.0
        %796 = vmatpush1.msra.mxu0 0.0
        %797 = vmatprep.subr.mxu0 0.0
        %798 = vmatpush1.msra.mxu0 0.0
        %799 = vmatprep.subr.mxu0 0.0
        %800 = vmatpush1.msra.mxu0 0.0
        %801 = vmatprep.subr.mxu0 0.0
        %802 = vmatpush1.msra.mxu0 0.0
        %803 = vmatprep.subr.mxu0 0.0
        %804 = vmatpush1.msra.mxu0 %v377
        %805 = vmatprep.subr.mxu0 0.0
        %806 = vmatpush1.msra.mxu0 %v376
        %807 = vmatprep.subr.mxu0 0.0
        %808 = vmatpush2.msra.mxu0 0.0
        %809 = vmatprep.subr.mxu0 0.0
        %810 = vmatpush2.msra.mxu0 0.0
        %811 = vmatprep.subr.mxu0 0.0
        %812 = vmatpush2.msra.mxu0 0.0
        %813 = vmatprep.subr.mxu0 0.0
        %814 = vmatpush2.msra.mxu0 0.0
        %815 = vmatprep.subr.mxu0 0.0
        %816 = vmatpush2.msra.mxu0 0.0
        %817 = vmatprep.subr.mxu0 0.0
        %818 = vmatpush2.msra.mxu0 0.0
        %819 = vmatprep.subr.mxu0 0.0
        %820 = vmatpush2.msra.mxu0 0.0
        %821 = vmatprep.subr.mxu0 0.0
        %822 = vmatpush2.msra.mxu0 0.0
        %823 = vmatprep.subr.mxu0 0.0
        %824 = vmatpush2.msra.mxu0 0.0
        %825 = vmatprep.subr.mxu0 0.0
        %826 = vmatpush2.msra.mxu0 0.0
        %827 = vmatprep.subr.mxu0 0.0
        %828 = vmatpush2.msra.mxu0 0.0
        %829 = vmatprep.subr.mxu0 0.0
        %830 = vmatpush2.msra.mxu0 0.0
        %831 = vmatprep.subr.mxu0 0.0
        %832 = vmatpush2.msra.mxu0 0.0
        %833 = vmatprep.subr.mxu0 0.0
        %834 = vmatpush2.msra.mxu0 0.0
        %835 = vmatprep.subr.mxu0 0.0
        %836 = vmatpush2.msra.mxu0 0.0
        %837 = vmatprep.subr.mxu0 0.0
        %838 = vmatpush2.msra.mxu0 0.0
        %839 = vmatprep.mubr.f32.mxu0 0.0
        %840 = vmatmul.mubr.f32.gmra.mxu0 %v752
        %v841 = vpop.f32.mrf.mxu0
        %v842 = vadd.f32 0.0, %v841
        %v843 = vpop.f32.mrf.mxu0
        %844 = vmatprep.mubr.f32.mxu0 0.0
        %845 = vmatmul.mubr.f32.gmra.mxu0 %v755
        %v846 = vpop.f32.mrf.mxu0
        %v847 = vadd.f32 0.0, %v846
        %v848 = vpop.f32.mrf.mxu0
        %849 = vmatprep.mubr.f32.mxu0 0.0
        %850 = vmatmul.mubr.f32.gmra.mxu0 %v758
        %v851 = vpop.f32.mrf.mxu0
        %v852 = vadd.f32 0.0, %v851
        %v853 = vpop.f32.mrf.mxu0
        %854 = vmatprep.mubr.f32.mxu0 0.0
        %855 = vmatmul.mubr.f32.gmra.mxu0 %v761
        %v856 = vpop.f32.mrf.mxu0
        %v857 = vadd.f32 0.0, %v856
        %v858 = vpop.f32.mrf.mxu0
        %859 = vmatprep.mubr.f32.mxu0 0.0
        %860 = vmatmul.mubr.f32.gmra.mxu0 %v764
        %v861 = vpop.f32.mrf.mxu0
        %v862 = vadd.f32 0.0, %v861
        %v863 = vpop.f32.mrf.mxu0
        %864 = vmatprep.mubr.f32.mxu0 0.0
        %865 = vmatmul.mubr.f32.gmra.mxu0 %v767
        %v866 = vpop.f32.mrf.mxu0
        %v867 = vadd.f32 0.0, %v866
        %v868 = vpop.f32.mrf.mxu0
        %869 = vmatprep.mubr.f32.mxu0 0.0
        %870 = vmatmul.mubr.f32.gmra.mxu0 %v770
        %v871 = vpop.f32.mrf.mxu0
        %v872 = vadd.f32 0.0, %v871
        %v873 = vpop.f32.mrf.mxu0
        %874 = vmatprep.mubr.f32.mxu0 0.0
        %875 = vmatmul.mubr.f32.gmra.mxu0 %v773
        %v876 = vpop.f32.mrf.mxu0
        %v877 = vadd.f32 0.0, %v876
        %v878 = vpop.f32.mrf.mxu0
        %879 = vdwg.mxu0
        %880 = vxpose.xlu0.b32.start [1/16] %v386, 128
        %881 = vxpose.xlu0.b32.cont [2/16] %v387, 128
        %882 = vxpose.xlu0.b32.cont [3/16] 0.0, 128
        %883 = vxpose.xlu0.b32.cont [4/16] 0.0, 128
        %884 = vxpose.xlu0.b32.cont [5/16] 0.0, 128
        %885 = vxpose.xlu0.b32.cont [6/16] 0.0, 128
        %886 = vxpose.xlu0.b32.cont [7/16] 0.0, 128
        %887 = vxpose.xlu0.b32.cont [8/16] 0.0, 128
        %888 = vxpose.xlu0.b32.cont [9/16] 0.0, 128
        %889 = vxpose.xlu0.b32.cont [10/16] 0.0, 128
        %890 = vxpose.xlu0.b32.cont [11/16] 0.0, 128
        %891 = vxpose.xlu0.b32.cont [12/16] 0.0, 128
        %892 = vxpose.xlu0.b32.cont [13/16] 0.0, 128
        %893 = vxpose.xlu0.b32.cont [14/16] 0.0, 128
        %894 = vxpose.xlu0.b32.cont [15/16] 0.0, 128
        %895 = vxpose.xlu0.b32.end [16/16] 0.0, 128
        %v896 = vpop.trf.xlu0
        %v897 = vpop.trf.xlu0
        %v898 = vpop.trf.xlu0
        %v899 = vpop.trf.xlu0
        %v900 = vpop.trf.xlu0
        %v901 = vpop.trf.xlu0
        %v902 = vpop.trf.xlu0
        %v903 = vpop.trf.xlu0
        %v904 = vpop.trf.xlu0
        %v905 = vpop.trf.xlu0
        %v906 = vpop.trf.xlu0
        %v907 = vpop.trf.xlu0
        %v908 = vpop.trf.xlu0
        %v909 = vpop.trf.xlu0
        %v910 = vpop.trf.xlu0
        %v911 = vpop.trf.xlu0
        %v913 = vsel %vm428, %v896, 0
        %v916 = vsel %vm428, %v897, 0
        %v919 = vsel %vm428, %v898, 0
        %v922 = vsel %vm428, %v899, 0
        %v925 = vsel %vm428, %v900, 0
        %v928 = vsel %vm428, %v901, 0
        %v931 = vsel %vm428, %v902, 0
        %v934 = vsel %vm428, %v903, 0
        %936 = vmatprep.subr.mxu0 0.0
        %937 = vmatpush1.msra.mxu0 0.0
        %938 = vmatprep.subr.mxu0 0.0
        %939 = vmatpush1.msra.mxu0 0.0
        %940 = vmatprep.subr.mxu0 0.0
        %941 = vmatpush1.msra.mxu0 0.0
        %942 = vmatprep.subr.mxu0 0.0
        %943 = vmatpush1.msra.mxu0 0.0
        %944 = vmatprep.subr.mxu0 0.0
        %945 = vmatpush1.msra.mxu0 0.0
        %946 = vmatprep.subr.mxu0 0.0
        %947 = vmatpush1.msra.mxu0 0.0
        %948 = vmatprep.subr.mxu0 0.0
        %949 = vmatpush1.msra.mxu0 0.0
        %950 = vmatprep.subr.mxu0 0.0
        %951 = vmatpush1.msra.mxu0 0.0
        %952 = vmatprep.subr.mxu0 0.0
        %953 = vmatpush1.msra.mxu0 0.0
        %954 = vmatprep.subr.mxu0 0.0
        %955 = vmatpush1.msra.mxu0 0.0
        %956 = vmatprep.subr.mxu0 0.0
        %957 = vmatpush1.msra.mxu0 0.0
        %958 = vmatprep.subr.mxu0 0.0
        %959 = vmatpush1.msra.mxu0 0.0
        %960 = vmatprep.subr.mxu0 0.0
        %961 = vmatpush1.msra.mxu0 0.0
        %962 = vmatprep.subr.mxu0 0.0
        %963 = vmatpush1.msra.mxu0 0.0
        %964 = vmatprep.subr.mxu0 0.0
        %965 = vmatpush1.msra.mxu0 %v379
        %966 = vmatprep.subr.mxu0 0.0
        %967 = vmatpush1.msra.mxu0 %v378
        %968 = vmatprep.subr.mxu0 0.0
        %969 = vmatpush2.msra.mxu0 0.0
        %970 = vmatprep.subr.mxu0 0.0
        %971 = vmatpush2.msra.mxu0 0.0
        %972 = vmatprep.subr.mxu0 0.0
        %973 = vmatpush2.msra.mxu0 0.0
        %974 = vmatprep.subr.mxu0 0.0
        %975 = vmatpush2.msra.mxu0 0.0
        %976 = vmatprep.subr.mxu0 0.0
        %977 = vmatpush2.msra.mxu0 0.0
        %978 = vmatprep.subr.mxu0 0.0
        %979 = vmatpush2.msra.mxu0 0.0
        %980 = vmatprep.subr.mxu0 0.0
        %981 = vmatpush2.msra.mxu0 0.0
        %982 = vmatprep.subr.mxu0 0.0
        %983 = vmatpush2.msra.mxu0 0.0
        %984 = vmatprep.subr.mxu0 0.0
        %985 = vmatpush2.msra.mxu0 0.0
        %986 = vmatprep.subr.mxu0 0.0
        %987 = vmatpush2.msra.mxu0 0.0
        %988 = vmatprep.subr.mxu0 0.0
        %989 = vmatpush2.msra.mxu0 0.0
        %990 = vmatprep.subr.mxu0 0.0
        %991 = vmatpush2.msra.mxu0 0.0
        %992 = vmatprep.subr.mxu0 0.0
        %993 = vmatpush2.msra.mxu0 0.0
        %994 = vmatprep.subr.mxu0 0.0
        %995 = vmatpush2.msra.mxu0 0.0
        %996 = vmatprep.subr.mxu0 0.0
        %997 = vmatpush2.msra.mxu0 0.0
        %998 = vmatprep.subr.mxu0 0.0
        %999 = vmatpush2.msra.mxu0 0.0
        %1000 = vmatprep.mubr.f32.mxu0 0.0
        %1001 = vmatmul.mubr.f32.gmra.mxu0 %v913
        %v1002 = vpop.f32.mrf.mxu0
        %v1003 = vadd.f32 0.0, %v1002
        %v1004 = vpop.f32.mrf.mxu0
        %1005 = vmatprep.mubr.f32.mxu0 0.0
        %1006 = vmatmul.mubr.f32.gmra.mxu0 %v916
        %v1007 = vpop.f32.mrf.mxu0
        %v1008 = vadd.f32 0.0, %v1007
        %v1009 = vpop.f32.mrf.mxu0
        %1010 = vmatprep.mubr.f32.mxu0 0.0
        %1011 = vmatmul.mubr.f32.gmra.mxu0 %v919
        %v1012 = vpop.f32.mrf.mxu0
        %v1013 = vadd.f32 0.0, %v1012
        %v1014 = vpop.f32.mrf.mxu0
        %1015 = vmatprep.mubr.f32.mxu0 0.0
        %1016 = vmatmul.mubr.f32.gmra.mxu0 %v922
        %v1017 = vpop.f32.mrf.mxu0
        %v1018 = vadd.f32 0.0, %v1017
        %v1019 = vpop.f32.mrf.mxu0
        %1020 = vmatprep.mubr.f32.mxu0 0.0
        %1021 = vmatmul.mubr.f32.gmra.mxu0 %v925
        %v1022 = vpop.f32.mrf.mxu0
        %v1023 = vadd.f32 0.0, %v1022
        %v1024 = vpop.f32.mrf.mxu0
        %1025 = vmatprep.mubr.f32.mxu0 0.0
        %1026 = vmatmul.mubr.f32.gmra.mxu0 %v928
        %v1027 = vpop.f32.mrf.mxu0
        %v1028 = vadd.f32 0.0, %v1027
        %v1029 = vpop.f32.mrf.mxu0
        %1030 = vmatprep.mubr.f32.mxu0 0.0
        %1031 = vmatmul.mubr.f32.gmra.mxu0 %v931
        %v1032 = vpop.f32.mrf.mxu0
        %v1033 = vadd.f32 0.0, %v1032
        %v1034 = vpop.f32.mrf.mxu0
        %1035 = vmatprep.mubr.f32.mxu0 0.0
        %1036 = vmatmul.mubr.f32.gmra.mxu0 %v934
        %v1037 = vpop.f32.mrf.mxu0
        %v1038 = vadd.f32 0.0, %v1037
        %v1039 = vpop.f32.mrf.mxu0
        %1040 = vdwg.mxu0
        %v1041 = vld [vmem:[#allocation3] sm:$0x1]
        %v1042 = vld [vmem:[#allocation3 + $0x1] sm:$0x1]
        %v1043 = vld [vmem:[#allocation3 + $0x2] sm:$0x1]
        %v1044 = vld [vmem:[#allocation3 + $0x3] sm:$0x1]
        %vm1045 = vcmask 523264
        %v1046 = vsel %vm1045, %v520, -inf
        %v1047 = vsel %vm1045, %v525, -inf
        %v1048 = vmax.f32 %v1046, %v1047
        %v1049 = vsel %vm1045, %v530, -inf
        %v1050 = vmax.f32 %v1048, %v1049
        %v1051 = vsel %vm1045, %v535, -inf
        %v1052 = vmax.f32 %v1050, %v1051
        %v1053 = vsel %vm1045, %v540, -inf
        %v1054 = vmax.f32 %v1052, %v1053
        %v1055 = vsel %vm1045, %v545, -inf
        %v1056 = vmax.f32 %v1054, %v1055
        %v1057 = vsel %vm1045, %v550, -inf
        %v1058 = vmax.f32 %v1056, %v1057
        %v1059 = vsel %vm1045, %v555, -inf
        %v1060 = vmax.f32 %v1058, %v1059
        %v1061 = vrot.slane %v1060, 4
        %v1062 = vmax.f32 %v1060, %v1061
        %v1063 = vrot.slane %v1062, 2
        %v1064 = vmax.f32 %v1062, %v1063
        %v1065 = vrot.slane %v1064, 1
        %v1066 = vmax.f32 %v1064, %v1065
        %v1067 = vsel %vm1045, %v681, -inf
        %v1068 = vsel %vm1045, %v686, -inf
        %v1069 = vmax.f32 %v1067, %v1068
        %v1070 = vsel %vm1045, %v691, -inf
        %v1071 = vmax.f32 %v1069, %v1070
        %v1072 = vsel %vm1045, %v696, -inf
        %v1073 = vmax.f32 %v1071, %v1072
        %v1074 = vsel %vm1045, %v701, -inf
        %v1075 = vmax.f32 %v1073, %v1074
        %v1076 = vsel %vm1045, %v706, -inf
        %v1077 = vmax.f32 %v1075, %v1076
        %v1078 = vsel %vm1045, %v711, -inf
        %v1079 = vmax.f32 %v1077, %v1078
        %v1080 = vsel %vm1045, %v716, -inf
        %v1081 = vmax.f32 %v1079, %v1080
        %v1082 = vrot.slane %v1081, 4
        %v1083 = vmax.f32 %v1081, %v1082
        %v1084 = vrot.slane %v1083, 2
        %v1085 = vmax.f32 %v1083, %v1084
        %v1086 = vrot.slane %v1085, 1
        %v1087 = vmax.f32 %v1085, %v1086
        %v1088 = vsel %vm1045, %v842, -inf
        %v1089 = vsel %vm1045, %v847, -inf
        %v1090 = vmax.f32 %v1088, %v1089
        %v1091 = vsel %vm1045, %v852, -inf
        %v1092 = vmax.f32 %v1090, %v1091
        %v1093 = vsel %vm1045, %v857, -inf
        %v1094 = vmax.f32 %v1092, %v1093
        %v1095 = vsel %vm1045, %v862, -inf
        %v1096 = vmax.f32 %v1094, %v1095
        %v1097 = vsel %vm1045, %v867, -inf
        %v1098 = vmax.f32 %v1096, %v1097
        %v1099 = vsel %vm1045, %v872, -inf
        %v1100 = vmax.f32 %v1098, %v1099
        %v1101 = vsel %vm1045, %v877, -inf
        %v1102 = vmax.f32 %v1100, %v1101
        %v1103 = vrot.slane %v1102, 4
        %v1104 = vmax.f32 %v1102, %v1103
        %v1105 = vrot.slane %v1104, 2
        %v1106 = vmax.f32 %v1104, %v1105
        %v1107 = vrot.slane %v1106, 1
        %v1108 = vmax.f32 %v1106, %v1107
        %v1109 = vsel %vm1045, %v1003, -inf
        %v1110 = vsel %vm1045, %v1008, -inf
        %v1111 = vmax.f32 %v1109, %v1110
        %v1112 = vsel %vm1045, %v1013, -inf
        %v1113 = vmax.f32 %v1111, %v1112
        %v1114 = vsel %vm1045, %v1018, -inf
        %v1115 = vmax.f32 %v1113, %v1114
        %v1116 = vsel %vm1045, %v1023, -inf
        %v1117 = vmax.f32 %v1115, %v1116
        %v1118 = vsel %vm1045, %v1028, -inf
        %v1119 = vmax.f32 %v1117, %v1118
        %v1120 = vsel %vm1045, %v1033, -inf
        %v1121 = vmax.f32 %v1119, %v1120
        %v1122 = vsel %vm1045, %v1038, -inf
        %v1123 = vmax.f32 %v1121, %v1122
        %v1124 = vrot.slane %v1123, 4
        %v1125 = vmax.f32 %v1123, %v1124
        %v1126 = vrot.slane %v1125, 2
        %v1127 = vmax.f32 %v1125, %v1126
        %v1128 = vrot.slane %v1127, 1
        %v1129 = vmax.f32 %v1127, %v1128
        %v1130 = vmax.f32 %v1041, %v1066
        %v1131 = vmax.f32 %v1042, %v1087
        %v1132 = vmax.f32 %v1043, %v1108
        %v1133 = vmax.f32 %v1044, %v1129
        %v1134 = vsub.f32 %v1041, %v1130
        %v1135 = vsub.f32 %v1042, %v1131
        %v1136 = vsub.f32 %v1043, %v1132
        %v1137 = vsub.f32 %v1044, %v1133
        %v1138 = vmul.f32 %v1134, 1.442695
        %v1139 = vpow.pop %v1138
        %v1140 = vmul.f32 %v1135, 1.442695
        %v1141 = vpow.pop %v1140
        %v1142 = vmul.f32 %v1136, 1.442695
        %v1143 = vpow.pop %v1142
        %v1144 = vmul.f32 %v1137, 1.442695
        %v1145 = vpow.pop %v1144
        %v1150 = vlaneseq
        %v1151 = vshrl.u32 %v1150, 7
        %v1152 = vsub.s32 0, %v1151
        %v1153 = vrot.slane %v1130, %v1152
        %v1154 = vlaneseq
        %v1155 = vshrl.u32 %v1154, 7
        %v1156 = vsub.s32 0, %v1155
        %v1157 = vrot.slane %v1131, %v1156
        %v1158 = vlaneseq
        %v1159 = vshrl.u32 %v1158, 7
        %v1160 = vsub.s32 0, %v1159
        %v1161 = vrot.slane %v1132, %v1160
        %v1162 = vlaneseq
        %v1163 = vshrl.u32 %v1162, 7
        %v1164 = vsub.s32 0, %v1163
        %v1165 = vrot.slane %v1133, %v1164
        %v1170 = vsub.f32 %v520, %v1153
        %v1171 = vsub.f32 %v525, %v1153
        %v1172 = vsub.f32 %v530, %v1153
        %v1173 = vsub.f32 %v535, %v1153
        %v1174 = vsub.f32 %v540, %v1153
        %v1175 = vsub.f32 %v545, %v1153
        %v1176 = vsub.f32 %v550, %v1153
        %v1177 = vsub.f32 %v555, %v1153
        %v1178 = vsub.f32 %v681, %v1157
        %v1179 = vsub.f32 %v686, %v1157
        %v1180 = vsub.f32 %v691, %v1157
        %v1181 = vsub.f32 %v696, %v1157
        %v1182 = vsub.f32 %v701, %v1157
        %v1183 = vsub.f32 %v706, %v1157
        %v1184 = vsub.f32 %v711, %v1157
        %v1185 = vsub.f32 %v716, %v1157
        %v1186 = vsub.f32 %v842, %v1161
        %v1187 = vsub.f32 %v847, %v1161
        %v1188 = vsub.f32 %v852, %v1161
        %v1189 = vsub.f32 %v857, %v1161
        %v1190 = vsub.f32 %v862, %v1161
        %v1191 = vsub.f32 %v867, %v1161
        %v1192 = vsub.f32 %v872, %v1161
        %v1193 = vsub.f32 %v877, %v1161
        %v1194 = vsub.f32 %v1003, %v1165
        %v1195 = vsub.f32 %v1008, %v1165
        %v1196 = vsub.f32 %v1013, %v1165
        %v1197 = vsub.f32 %v1018, %v1165
        %v1198 = vsub.f32 %v1023, %v1165
        %v1199 = vsub.f32 %v1028, %v1165
        %v1200 = vsub.f32 %v1033, %v1165
        %v1201 = vsub.f32 %v1038, %v1165
        %v1202 = vmul.f32 %v1170, 1.442695
        %v1203 = vpow.pop %v1202
        %v1204 = vmul.f32 %v1171, 1.442695
        %v1205 = vpow.pop %v1204
        %v1206 = vmul.f32 %v1172, 1.442695
        %v1207 = vpow.pop %v1206
        %v1208 = vmul.f32 %v1173, 1.442695
        %v1209 = vpow.pop %v1208
        %v1210 = vmul.f32 %v1174, 1.442695
        %v1211 = vpow.pop %v1210
        %v1212 = vmul.f32 %v1175, 1.442695
        %v1213 = vpow.pop %v1212
        %v1214 = vmul.f32 %v1176, 1.442695
        %v1215 = vpow.pop %v1214
        %v1216 = vmul.f32 %v1177, 1.442695
        %v1217 = vpow.pop %v1216
        %v1218 = vmul.f32 %v1178, 1.442695
        %v1219 = vpow.pop %v1218
        %v1220 = vmul.f32 %v1179, 1.442695
        %v1221 = vpow.pop %v1220
        %v1222 = vmul.f32 %v1180, 1.442695
        %v1223 = vpow.pop %v1222
        %v1224 = vmul.f32 %v1181, 1.442695
        %v1225 = vpow.pop %v1224
        %v1226 = vmul.f32 %v1182, 1.442695
        %v1227 = vpow.pop %v1226
        %v1228 = vmul.f32 %v1183, 1.442695
        %v1229 = vpow.pop %v1228
        %v1230 = vmul.f32 %v1184, 1.442695
        %v1231 = vpow.pop %v1230
        %v1232 = vmul.f32 %v1185, 1.442695
        %v1233 = vpow.pop %v1232
        %v1234 = vmul.f32 %v1186, 1.442695
        %v1235 = vpow.pop %v1234
        %v1236 = vmul.f32 %v1187, 1.442695
        %v1237 = vpow.pop %v1236
        %v1238 = vmul.f32 %v1188, 1.442695
        %v1239 = vpow.pop %v1238
        %v1240 = vmul.f32 %v1189, 1.442695
        %v1241 = vpow.pop %v1240
        %v1242 = vmul.f32 %v1190, 1.442695
        %v1243 = vpow.pop %v1242
        %v1244 = vmul.f32 %v1191, 1.442695
        %v1245 = vpow.pop %v1244
        %v1246 = vmul.f32 %v1192, 1.442695
        %v1247 = vpow.pop %v1246
        %v1248 = vmul.f32 %v1193, 1.442695
        %v1249 = vpow.pop %v1248
        %v1250 = vmul.f32 %v1194, 1.442695
        %v1251 = vpow.pop %v1250
        %v1252 = vmul.f32 %v1195, 1.442695
        %v1253 = vpow.pop %v1252
        %v1254 = vmul.f32 %v1196, 1.442695
        %v1255 = vpow.pop %v1254
        %v1256 = vmul.f32 %v1197, 1.442695
        %v1257 = vpow.pop %v1256
        %v1258 = vmul.f32 %v1198, 1.442695
        %v1259 = vpow.pop %v1258
        %v1260 = vmul.f32 %v1199, 1.442695
        %v1261 = vpow.pop %v1260
        %v1262 = vmul.f32 %v1200, 1.442695
        %v1263 = vpow.pop %v1262
        %v1264 = vmul.f32 %v1201, 1.442695
        %v1265 = vpow.pop %v1264
        %v1266 = vld [vmem:[#allocation4] sm:$0x1]
        %v1267 = vld [vmem:[#allocation4 + $0x1] sm:$0x1]
        %v1268 = vld [vmem:[#allocation4 + $0x2] sm:$0x1]
        %v1269 = vld [vmem:[#allocation4 + $0x3] sm:$0x1]
        %v1270 = vmul.f32 %v1139, %v1266
        %v1271 = vmul.f32 %v1141, %v1267
        %v1272 = vmul.f32 %v1143, %v1268
        %v1273 = vmul.f32 %v1145, %v1269
        %v1274 = vsel %vm1045, %v1203, 0.0
        %v1275 = vsel %vm1045, %v1205, 0.0
        %v1276 = vadd.f32 %v1274, %v1275
        %v1277 = vsel %vm1045, %v1207, 0.0
        %v1278 = vadd.f32 %v1276, %v1277
        %v1279 = vsel %vm1045, %v1209, 0.0
        %v1280 = vadd.f32 %v1278, %v1279
        %v1281 = vsel %vm1045, %v1211, 0.0
        %v1282 = vadd.f32 %v1280, %v1281
        %v1283 = vsel %vm1045, %v1213, 0.0
        %v1284 = vadd.f32 %v1282, %v1283
        %v1285 = vsel %vm1045, %v1215, 0.0
        %v1286 = vadd.f32 %v1284, %v1285
        %v1287 = vsel %vm1045, %v1217, 0.0
        %v1288 = vadd.f32 %v1286, %v1287
        %v1289 = vrot.slane %v1288, 4
        %v1290 = vadd.f32 %v1288, %v1289
        %v1291 = vrot.slane %v1290, 2
        %v1292 = vadd.f32 %v1290, %v1291
        %v1293 = vrot.slane %v1292, 1
        %v1294 = vadd.f32 %v1292, %v1293
        %v1295 = vsel %vm1045, %v1219, 0.0
        %v1296 = vsel %vm1045, %v1221, 0.0
        %v1297 = vadd.f32 %v1295, %v1296
        %v1298 = vsel %vm1045, %v1223, 0.0
        %v1299 = vadd.f32 %v1297, %v1298
        %v1300 = vsel %vm1045, %v1225, 0.0
        %v1301 = vadd.f32 %v1299, %v1300
        %v1302 = vsel %vm1045, %v1227, 0.0
        %v1303 = vadd.f32 %v1301, %v1302
        %v1304 = vsel %vm1045, %v1229, 0.0
        %v1305 = vadd.f32 %v1303, %v1304
        %v1306 = vsel %vm1045, %v1231, 0.0
        %v1307 = vadd.f32 %v1305, %v1306
        %v1308 = vsel %vm1045, %v1233, 0.0
        %v1309 = vadd.f32 %v1307, %v1308
        %v1310 = vrot.slane %v1309, 4
        %v1311 = vadd.f32 %v1309, %v1310
        %v1312 = vrot.slane %v1311, 2
        %v1313 = vadd.f32 %v1311, %v1312
        %v1314 = vrot.slane %v1313, 1
        %v1315 = vadd.f32 %v1313, %v1314
        %v1316 = vsel %vm1045, %v1235, 0.0
        %v1317 = vsel %vm1045, %v1237, 0.0
        %v1318 = vadd.f32 %v1316, %v1317
        %v1319 = vsel %vm1045, %v1239, 0.0
        %v1320 = vadd.f32 %v1318, %v1319
        %v1321 = vsel %vm1045, %v1241, 0.0
        %v1322 = vadd.f32 %v1320, %v1321
        %v1323 = vsel %vm1045, %v1243, 0.0
        %v1324 = vadd.f32 %v1322, %v1323
        %v1325 = vsel %vm1045, %v1245, 0.0
        %v1326 = vadd.f32 %v1324, %v1325
        %v1327 = vsel %vm1045, %v1247, 0.0
        %v1328 = vadd.f32 %v1326, %v1327
        %v1329 = vsel %vm1045, %v1249, 0.0
        %v1330 = vadd.f32 %v1328, %v1329
        %v1331 = vrot.slane %v1330, 4
        %v1332 = vadd.f32 %v1330, %v1331
        %v1333 = vrot.slane %v1332, 2
        %v1334 = vadd.f32 %v1332, %v1333
        %v1335 = vrot.slane %v1334, 1
        %v1336 = vadd.f32 %v1334, %v1335
        %v1337 = vsel %vm1045, %v1251, 0.0
        %v1338 = vsel %vm1045, %v1253, 0.0
        %v1339 = vadd.f32 %v1337, %v1338
        %v1340 = vsel %vm1045, %v1255, 0.0
        %v1341 = vadd.f32 %v1339, %v1340
        %v1342 = vsel %vm1045, %v1257, 0.0
        %v1343 = vadd.f32 %v1341, %v1342
        %v1344 = vsel %vm1045, %v1259, 0.0
        %v1345 = vadd.f32 %v1343, %v1344
        %v1346 = vsel %vm1045, %v1261, 0.0
        %v1347 = vadd.f32 %v1345, %v1346
        %v1348 = vsel %vm1045, %v1263, 0.0
        %v1349 = vadd.f32 %v1347, %v1348
        %v1350 = vsel %vm1045, %v1265, 0.0
        %v1351 = vadd.f32 %v1349, %v1350
        %v1352 = vrot.slane %v1351, 4
        %v1353 = vadd.f32 %v1351, %v1352
        %v1354 = vrot.slane %v1353, 2
        %v1355 = vadd.f32 %v1353, %v1354
        %v1356 = vrot.slane %v1355, 1
        %v1357 = vadd.f32 %v1355, %v1356
        %v1358 = vadd.f32 %v1270, %v1294
        %v1359 = vadd.f32 %v1271, %v1315
        %v1360 = vadd.f32 %v1272, %v1336
        %v1361 = vadd.f32 %v1273, %v1357
        %vm1362 = vcmask 516096
        %1363 = vst.msk [vmem:[#allocation4] sm:$0x1] %vm1362, %v1358
        %1364 = vst.msk [vmem:[#allocation4 + $0x1] sm:$0x1] %vm1362, %v1359
        %1365 = vst.msk [vmem:[#allocation4 + $0x2] sm:$0x1] %vm1362, %v1360
        %1366 = vst.msk [vmem:[#allocation4 + $0x3] sm:$0x1] %vm1362, %v1361
        %v1368 = vsel %vm1045, %v388, 0
        %v1371 = vsel %vm1045, %v389, 0
        %1373 = vmatprep.subr.mxu0 0.0
        %1374 = vmatpush1.msra.mxu0 0.0
        %1375 = vmatprep.subr.mxu0 0.0
        %1376 = vmatpush1.msra.mxu0 0.0
        %1377 = vmatprep.subr.mxu0 0.0
        %1378 = vmatpush1.msra.mxu0 0.0
        %1379 = vmatprep.subr.mxu0 0.0
        %1380 = vmatpush1.msra.mxu0 0.0
        %1381 = vmatprep.subr.mxu0 0.0
        %1382 = vmatpush1.msra.mxu0 0.0
        %1383 = vmatprep.subr.mxu0 0.0
        %1384 = vmatpush1.msra.mxu0 0.0
        %1385 = vmatprep.subr.mxu0 0.0
        %1386 = vmatpush1.msra.mxu0 0.0
        %1387 = vmatprep.subr.mxu0 0.0
        %1388 = vmatpush1.msra.mxu0 0.0
        %1389 = vmatprep.subr.mxu0 0.0
        %1390 = vmatpush1.msra.mxu0 %v1217
        %1391 = vmatprep.subr.mxu0 0.0
        %1392 = vmatpush1.msra.mxu0 %v1215
        %1393 = vmatprep.subr.mxu0 0.0
        %1394 = vmatpush1.msra.mxu0 %v1213
        %1395 = vmatprep.subr.mxu0 0.0
        %1396 = vmatpush1.msra.mxu0 %v1211
        %1397 = vmatprep.subr.mxu0 0.0
        %1398 = vmatpush1.msra.mxu0 %v1209
        %1399 = vmatprep.subr.mxu0 0.0
        %1400 = vmatpush1.msra.mxu0 %v1207
        %1401 = vmatprep.subr.mxu0 0.0
        %1402 = vmatpush1.msra.mxu0 %v1205
        %1403 = vmatprep.subr.mxu0 0.0
        %1404 = vmatpush1.msra.mxu0 %v1203
        %1405 = vmatprep.subr.mxu0 0.0
        %1406 = vmatpush2.msra.mxu0 0.0
        %1407 = vmatprep.subr.mxu0 0.0
        %1408 = vmatpush2.msra.mxu0 0.0
        %1409 = vmatprep.subr.mxu0 0.0
        %1410 = vmatpush2.msra.mxu0 0.0
        %1411 = vmatprep.subr.mxu0 0.0
        %1412 = vmatpush2.msra.mxu0 0.0
        %1413 = vmatprep.subr.mxu0 0.0
        %1414 = vmatpush2.msra.mxu0 0.0
        %1415 = vmatprep.subr.mxu0 0.0
        %1416 = vmatpush2.msra.mxu0 0.0
        %1417 = vmatprep.subr.mxu0 0.0
        %1418 = vmatpush2.msra.mxu0 0.0
        %1419 = vmatprep.subr.mxu0 0.0
        %1420 = vmatpush2.msra.mxu0 0.0
        %1421 = vmatprep.subr.mxu0 0.0
        %1422 = vmatpush2.msra.mxu0 0.0
        %1423 = vmatprep.subr.mxu0 0.0
        %1424 = vmatpush2.msra.mxu0 0.0
        %1425 = vmatprep.subr.mxu0 0.0
        %1426 = vmatpush2.msra.mxu0 0.0
        %1427 = vmatprep.subr.mxu0 0.0
        %1428 = vmatpush2.msra.mxu0 0.0
        %1429 = vmatprep.subr.mxu0 0.0
        %1430 = vmatpush2.msra.mxu0 0.0
        %1431 = vmatprep.subr.mxu0 0.0
        %1432 = vmatpush2.msra.mxu0 0.0
        %1433 = vmatprep.subr.mxu0 0.0
        %1434 = vmatpush2.msra.mxu0 0.0
        %1435 = vmatprep.subr.mxu0 0.0
        %1436 = vmatpush2.msra.mxu0 0.0
        %1437 = vmatprep.mubr.f32.mxu0 0.0
        %1438 = vmatmul.mubr.f32.gmra.mxu0 %v1368
        %v1439 = vpop.f32.mrf.mxu0
        %v1440 = vadd.f32 0.0, %v1439
        %v1441 = vpop.f32.mrf.mxu0
        %1442 = vmatprep.mubr.f32.mxu0 0.0
        %1443 = vmatmul.mubr.f32.gmra.mxu0 %v1371
        %v1444 = vpop.f32.mrf.mxu0
        %v1445 = vadd.f32 0.0, %v1444
        %v1446 = vpop.f32.mrf.mxu0
        %1447 = vdwg.mxu0
        %v1449 = vsel %vm1045, %v390, 0
        %v1452 = vsel %vm1045, %v391, 0
        %1454 = vmatprep.subr.mxu0 0.0
        %1455 = vmatpush1.msra.mxu0 0.0
        %1456 = vmatprep.subr.mxu0 0.0
        %1457 = vmatpush1.msra.mxu0 0.0
        %1458 = vmatprep.subr.mxu0 0.0
        %1459 = vmatpush1.msra.mxu0 0.0
        %1460 = vmatprep.subr.mxu0 0.0
        %1461 = vmatpush1.msra.mxu0 0.0
        %1462 = vmatprep.subr.mxu0 0.0
        %1463 = vmatpush1.msra.mxu0 0.0
        %1464 = vmatprep.subr.mxu0 0.0
        %1465 = vmatpush1.msra.mxu0 0.0
        %1466 = vmatprep.subr.mxu0 0.0
        %1467 = vmatpush1.msra.mxu0 0.0
        %1468 = vmatprep.subr.mxu0 0.0
        %1469 = vmatpush1.msra.mxu0 0.0
        %1470 = vmatprep.subr.mxu0 0.0
        %1471 = vmatpush1.msra.mxu0 %v1233
        %1472 = vmatprep.subr.mxu0 0.0
        %1473 = vmatpush1.msra.mxu0 %v1231
        %1474 = vmatprep.subr.mxu0 0.0
        %1475 = vmatpush1.msra.mxu0 %v1229
        %1476 = vmatprep.subr.mxu0 0.0
        %1477 = vmatpush1.msra.mxu0 %v1227
        %1478 = vmatprep.subr.mxu0 0.0
        %1479 = vmatpush1.msra.mxu0 %v1225
        %1480 = vmatprep.subr.mxu0 0.0
        %1481 = vmatpush1.msra.mxu0 %v1223
        %1482 = vmatprep.subr.mxu0 0.0
        %1483 = vmatpush1.msra.mxu0 %v1221
        %1484 = vmatprep.subr.mxu0 0.0
        %1485 = vmatpush1.msra.mxu0 %v1219
        %1486 = vmatprep.subr.mxu0 0.0
        %1487 = vmatpush2.msra.mxu0 0.0
        %1488 = vmatprep.subr.mxu0 0.0
        %1489 = vmatpush2.msra.mxu0 0.0
        %1490 = vmatprep.subr.mxu0 0.0
        %1491 = vmatpush2.msra.mxu0 0.0
        %1492 = vmatprep.subr.mxu0 0.0
        %1493 = vmatpush2.msra.mxu0 0.0
        %1494 = vmatprep.subr.mxu0 0.0
        %1495 = vmatpush2.msra.mxu0 0.0
        %1496 = vmatprep.subr.mxu0 0.0
        %1497 = vmatpush2.msra.mxu0 0.0
        %1498 = vmatprep.subr.mxu0 0.0
        %1499 = vmatpush2.msra.mxu0 0.0
        %1500 = vmatprep.subr.mxu0 0.0
        %1501 = vmatpush2.msra.mxu0 0.0
        %1502 = vmatprep.subr.mxu0 0.0
        %1503 = vmatpush2.msra.mxu0 0.0
        %1504 = vmatprep.subr.mxu0 0.0
        %1505 = vmatpush2.msra.mxu0 0.0
        %1506 = vmatprep.subr.mxu0 0.0
        %1507 = vmatpush2.msra.mxu0 0.0
        %1508 = vmatprep.subr.mxu0 0.0
        %1509 = vmatpush2.msra.mxu0 0.0
        %1510 = vmatprep.subr.mxu0 0.0
        %1511 = vmatpush2.msra.mxu0 0.0
        %1512 = vmatprep.subr.mxu0 0.0
        %1513 = vmatpush2.msra.mxu0 0.0
        %1514 = vmatprep.subr.mxu0 0.0
        %1515 = vmatpush2.msra.mxu0 0.0
        %1516 = vmatprep.subr.mxu0 0.0
        %1517 = vmatpush2.msra.mxu0 0.0
        %1518 = vmatprep.mubr.f32.mxu0 0.0
        %1519 = vmatmul.mubr.f32.gmra.mxu0 %v1449
        %v1520 = vpop.f32.mrf.mxu0
        %v1521 = vadd.f32 0.0, %v1520
        %v1522 = vpop.f32.mrf.mxu0
        %1523 = vmatprep.mubr.f32.mxu0 0.0
        %1524 = vmatmul.mubr.f32.gmra.mxu0 %v1452
        %v1525 = vpop.f32.mrf.mxu0
        %v1526 = vadd.f32 0.0, %v1525
        %v1527 = vpop.f32.mrf.mxu0
        %1528 = vdwg.mxu0
        %v1530 = vsel %vm1045, %v392, 0
        %v1533 = vsel %vm1045, %v393, 0
        %1535 = vmatprep.subr.mxu0 0.0
        %1536 = vmatpush1.msra.mxu0 0.0
        %1537 = vmatprep.subr.mxu0 0.0
        %1538 = vmatpush1.msra.mxu0 0.0
        %1539 = vmatprep.subr.mxu0 0.0
        %1540 = vmatpush1.msra.mxu0 0.0
        %1541 = vmatprep.subr.mxu0 0.0
        %1542 = vmatpush1.msra.mxu0 0.0
        %1543 = vmatprep.subr.mxu0 0.0
        %1544 = vmatpush1.msra.mxu0 0.0
        %1545 = vmatprep.subr.mxu0 0.0
        %1546 = vmatpush1.msra.mxu0 0.0
        %1547 = vmatprep.subr.mxu0 0.0
        %1548 = vmatpush1.msra.mxu0 0.0
        %1549 = vmatprep.subr.mxu0 0.0
        %1550 = vmatpush1.msra.mxu0 0.0
        %1551 = vmatprep.subr.mxu0 0.0
        %1552 = vmatpush1.msra.mxu0 %v1249
        %1553 = vmatprep.subr.mxu0 0.0
        %1554 = vmatpush1.msra.mxu0 %v1247
        %1555 = vmatprep.subr.mxu0 0.0
        %1556 = vmatpush1.msra.mxu0 %v1245
        %1557 = vmatprep.subr.mxu0 0.0
        %1558 = vmatpush1.msra.mxu0 %v1243
        %1559 = vmatprep.subr.mxu0 0.0
        %1560 = vmatpush1.msra.mxu0 %v1241
        %1561 = vmatprep.subr.mxu0 0.0
        %1562 = vmatpush1.msra.mxu0 %v1239
        %1563 = vmatprep.subr.mxu0 0.0
        %1564 = vmatpush1.msra.mxu0 %v1237
        %1565 = vmatprep.subr.mxu0 0.0
        %1566 = vmatpush1.msra.mxu0 %v1235
        %1567 = vmatprep.subr.mxu0 0.0
        %1568 = vmatpush2.msra.mxu0 0.0
        %1569 = vmatprep.subr.mxu0 0.0
        %1570 = vmatpush2.msra.mxu0 0.0
        %1571 = vmatprep.subr.mxu0 0.0
        %1572 = vmatpush2.msra.mxu0 0.0
        %1573 = vmatprep.subr.mxu0 0.0
        %1574 = vmatpush2.msra.mxu0 0.0
        %1575 = vmatprep.subr.mxu0 0.0
        %1576 = vmatpush2.msra.mxu0 0.0
        %1577 = vmatprep.subr.mxu0 0.0
        %1578 = vmatpush2.msra.mxu0 0.0
        %1579 = vmatprep.subr.mxu0 0.0
        %1580 = vmatpush2.msra.mxu0 0.0
        %1581 = vmatprep.subr.mxu0 0.0
        %1582 = vmatpush2.msra.mxu0 0.0
        %1583 = vmatprep.subr.mxu0 0.0
        %1584 = vmatpush2.msra.mxu0 0.0
        %1585 = vmatprep.subr.mxu0 0.0
        %1586 = vmatpush2.msra.mxu0 0.0
        %1587 = vmatprep.subr.mxu0 0.0
        %1588 = vmatpush2.msra.mxu0 0.0
        %1589 = vmatprep.subr.mxu0 0.0
        %1590 = vmatpush2.msra.mxu0 0.0
        %1591 = vmatprep.subr.mxu0 0.0
        %1592 = vmatpush2.msra.mxu0 0.0
        %1593 = vmatprep.subr.mxu0 0.0
        %1594 = vmatpush2.msra.mxu0 0.0
        %1595 = vmatprep.subr.mxu0 0.0
        %1596 = vmatpush2.msra.mxu0 0.0
        %1597 = vmatprep.subr.mxu0 0.0
        %1598 = vmatpush2.msra.mxu0 0.0
        %1599 = vmatprep.mubr.f32.mxu0 0.0
        %1600 = vmatmul.mubr.f32.gmra.mxu0 %v1530
        %v1601 = vpop.f32.mrf.mxu0
        %v1602 = vadd.f32 0.0, %v1601
        %v1603 = vpop.f32.mrf.mxu0
        %1604 = vmatprep.mubr.f32.mxu0 0.0
        %1605 = vmatmul.mubr.f32.gmra.mxu0 %v1533
        %v1606 = vpop.f32.mrf.mxu0
        %v1607 = vadd.f32 0.0, %v1606
        %v1608 = vpop.f32.mrf.mxu0
        %1609 = vdwg.mxu0
        %v1611 = vsel %vm1045, %v394, 0
        %v1614 = vsel %vm1045, %v395, 0
        %1616 = vmatprep.subr.mxu0 0.0
        %1617 = vmatpush1.msra.mxu0 0.0
        %1618 = vmatprep.subr.mxu0 0.0
        %1619 = vmatpush1.msra.mxu0 0.0
        %1620 = vmatprep.subr.mxu0 0.0
        %1621 = vmatpush1.msra.mxu0 0.0
        %1622 = vmatprep.subr.mxu0 0.0
        %1623 = vmatpush1.msra.mxu0 0.0
        %1624 = vmatprep.subr.mxu0 0.0
        %1625 = vmatpush1.msra.mxu0 0.0
        %1626 = vmatprep.subr.mxu0 0.0
        %1627 = vmatpush1.msra.mxu0 0.0
        %1628 = vmatprep.subr.mxu0 0.0
        %1629 = vmatpush1.msra.mxu0 0.0
        %1630 = vmatprep.subr.mxu0 0.0
        %1631 = vmatpush1.msra.mxu0 0.0
        %1632 = vmatprep.subr.mxu0 0.0
        %1633 = vmatpush1.msra.mxu0 %v1265
        %1634 = vmatprep.subr.mxu0 0.0
        %1635 = vmatpush1.msra.mxu0 %v1263
        %1636 = vmatprep.subr.mxu0 0.0
        %1637 = vmatpush1.msra.mxu0 %v1261
        %1638 = vmatprep.subr.mxu0 0.0
        %1639 = vmatpush1.msra.mxu0 %v1259
        %1640 = vmatprep.subr.mxu0 0.0
        %1641 = vmatpush1.msra.mxu0 %v1257
        %1642 = vmatprep.subr.mxu0 0.0
        %1643 = vmatpush1.msra.mxu0 %v1255
        %1644 = vmatprep.subr.mxu0 0.0
        %1645 = vmatpush1.msra.mxu0 %v1253
        %1646 = vmatprep.subr.mxu0 0.0
        %1647 = vmatpush1.msra.mxu0 %v1251
        %1648 = vmatprep.subr.mxu0 0.0
        %1649 = vmatpush2.msra.mxu0 0.0
        %1650 = vmatprep.subr.mxu0 0.0
        %1651 = vmatpush2.msra.mxu0 0.0
        %1652 = vmatprep.subr.mxu0 0.0
        %1653 = vmatpush2.msra.mxu0 0.0
        %1654 = vmatprep.subr.mxu0 0.0
        %1655 = vmatpush2.msra.mxu0 0.0
        %1656 = vmatprep.subr.mxu0 0.0
        %1657 = vmatpush2.msra.mxu0 0.0
        %1658 = vmatprep.subr.mxu0 0.0
        %1659 = vmatpush2.msra.mxu0 0.0
        %1660 = vmatprep.subr.mxu0 0.0
        %1661 = vmatpush2.msra.mxu0 0.0
        %1662 = vmatprep.subr.mxu0 0.0
        %1663 = vmatpush2.msra.mxu0 0.0
        %1664 = vmatprep.subr.mxu0 0.0
        %1665 = vmatpush2.msra.mxu0 0.0
        %1666 = vmatprep.subr.mxu0 0.0
        %1667 = vmatpush2.msra.mxu0 0.0
        %1668 = vmatprep.subr.mxu0 0.0
        %1669 = vmatpush2.msra.mxu0 0.0
        %1670 = vmatprep.subr.mxu0 0.0
        %1671 = vmatpush2.msra.mxu0 0.0
        %1672 = vmatprep.subr.mxu0 0.0
        %1673 = vmatpush2.msra.mxu0 0.0
        %1674 = vmatprep.subr.mxu0 0.0
        %1675 = vmatpush2.msra.mxu0 0.0
        %1676 = vmatprep.subr.mxu0 0.0
        %1677 = vmatpush2.msra.mxu0 0.0
        %1678 = vmatprep.subr.mxu0 0.0
        %1679 = vmatpush2.msra.mxu0 0.0
        %1680 = vmatprep.mubr.f32.mxu0 0.0
        %1681 = vmatmul.mubr.f32.gmra.mxu0 %v1611
        %v1682 = vpop.f32.mrf.mxu0
        %v1683 = vadd.f32 0.0, %v1682
        %v1684 = vpop.f32.mrf.mxu0
        %1685 = vmatprep.mubr.f32.mxu0 0.0
        %1686 = vmatmul.mubr.f32.gmra.mxu0 %v1614
        %v1687 = vpop.f32.mrf.mxu0
        %v1688 = vadd.f32 0.0, %v1687
        %v1689 = vpop.f32.mrf.mxu0
        %1690 = vdwg.mxu0
        %v1691 = vld [vmem:[#allocation5] sm:$0xff]
        %v1692 = vld [vmem:[#allocation5 + $0x8] sm:$0xff]
        %v1693 = vld [vmem:[#allocation5 + $0x10] sm:$0xff]
        %v1694 = vld [vmem:[#allocation5 + $0x18] sm:$0xff]
        %v1695 = vld [vmem:[#allocation5 + $0x20] sm:$0xff]
        %v1696 = vld [vmem:[#allocation5 + $0x28] sm:$0xff]
        %v1697 = vld [vmem:[#allocation5 + $0x30] sm:$0xff]
        %v1698 = vld [vmem:[#allocation5 + $0x38] sm:$0xff]
        %v1703 = vlaneseq
        %v1704 = vshrl.u32 %v1703, 7
        %v1705 = vsub.s32 0, %v1704
        %v1706 = vrot.slane %v1139, %v1705
        %v1707 = vlaneseq
        %v1708 = vshrl.u32 %v1707, 7
        %v1709 = vsub.s32 0, %v1708
        %v1710 = vrot.slane %v1141, %v1709
        %v1711 = vlaneseq
        %v1712 = vshrl.u32 %v1711, 7
        %v1713 = vsub.s32 0, %v1712
        %v1714 = vrot.slane %v1143, %v1713
        %v1715 = vlaneseq
        %v1716 = vshrl.u32 %v1715, 7
        %v1717 = vsub.s32 0, %v1716
        %v1718 = vrot.slane %v1145, %v1717
        %v1723 = vmul.f32 %v1706, %v1691
        %v1724 = vmul.f32 %v1706, %v1692
        %v1725 = vmul.f32 %v1710, %v1693
        %v1726 = vmul.f32 %v1710, %v1694
        %v1727 = vmul.f32 %v1714, %v1695
        %v1728 = vmul.f32 %v1714, %v1696
        %v1729 = vmul.f32 %v1718, %v1697
        %v1730 = vmul.f32 %v1718, %v1698
        %v1731 = vadd.f32 %v1723, %v1440
        %v1732 = vadd.f32 %v1724, %v1445
        %v1733 = vadd.f32 %v1725, %v1521
        %v1734 = vadd.f32 %v1726, %v1526
        %v1735 = vadd.f32 %v1727, %v1602
        %v1736 = vadd.f32 %v1728, %v1607
        %v1737 = vadd.f32 %v1729, %v1683
        %v1738 = vadd.f32 %v1730, %v1688
        %1739 = vst.msk [vmem:[#allocation5] sm:$0xff] %vm1045, %v1731
        %1740 = vst.msk [vmem:[#allocation5 + $0x8] sm:$0xff] %vm1045, %v1732
        %1741 = vst.msk [vmem:[#allocation5 + $0x10] sm:$0xff] %vm1045, %v1733
        %1742 = vst.msk [vmem:[#allocation5 + $0x18] sm:$0xff] %vm1045, %v1734
        %1743 = vst.msk [vmem:[#allocation5 + $0x20] sm:$0xff] %vm1045, %v1735
        %1744 = vst.msk [vmem:[#allocation5 + $0x28] sm:$0xff] %vm1045, %v1736
        %1745 = vst.msk [vmem:[#allocation5 + $0x30] sm:$0xff] %vm1045, %v1737
        %1746 = vst.msk [vmem:[#allocation5 + $0x38] sm:$0xff] %vm1045, %v1738
        %1747 = vst.msk [vmem:[#allocation3] sm:$0x1] %vm1362, %v1130
        %1748 = vst.msk [vmem:[#allocation3 + $0x1] sm:$0x1] %vm1362, %v1131
        %1749 = vst.msk [vmem:[#allocation3 + $0x2] sm:$0x1] %vm1362, %v1132
        %1750 = vst.msk [vmem:[#allocation3 + $0x3] sm:$0x1] %vm1362, %v1133
        // Predicated region
        $region49: #{tpu_custom_call.1} parent=31 // pred_check
          %p1751 = pneg %p326
        $region50: #{tpu_custom_call.1} parent=31 // pred_check_branch
          %1753 = sbr.rel (%p1751) target = $region52
        $region51: #{tpu_custom_call.1} parent=31 // pred_region
          %v1754 = vld [vmem:[#allocation4] sm:$0x1]
          %v1755 = vld [vmem:[#allocation4 + $0x1] sm:$0x1]
          %v1756 = vld [vmem:[#allocation4 + $0x2] sm:$0x1]
          %v1757 = vld [vmem:[#allocation4 + $0x3] sm:$0x1]
          %v1758 = vrcp.pop %v1754
          %v1759 = vrcp.pop %v1755
          %v1760 = vrcp.pop %v1756
          %v1761 = vrcp.pop %v1757
          %v1762 = vld [vmem:[#allocation5] sm:$0xff]
          %v1763 = vld [vmem:[#allocation5 + $0x8] sm:$0xff]
          %v1764 = vld [vmem:[#allocation5 + $0x10] sm:$0xff]
          %v1765 = vld [vmem:[#allocation5 + $0x18] sm:$0xff]
          %v1766 = vld [vmem:[#allocation5 + $0x20] sm:$0xff]
          %v1767 = vld [vmem:[#allocation5 + $0x28] sm:$0xff]
          %v1768 = vld [vmem:[#allocation5 + $0x30] sm:$0xff]
          %v1769 = vld [vmem:[#allocation5 + $0x38] sm:$0xff]
          %v1774 = vlaneseq
          %v1775 = vshrl.u32 %v1774, 7
          %v1776 = vsub.s32 0, %v1775
          %v1777 = vrot.slane %v1758, %v1776
          %v1778 = vlaneseq
          %v1779 = vshrl.u32 %v1778, 7
          %v1780 = vsub.s32 0, %v1779
          %v1781 = vrot.slane %v1759, %v1780
          %v1782 = vlaneseq
          %v1783 = vshrl.u32 %v1782, 7
          %v1784 = vsub.s32 0, %v1783
          %v1785 = vrot.slane %v1760, %v1784
          %v1786 = vlaneseq
          %v1787 = vshrl.u32 %v1786, 7
          %v1788 = vsub.s32 0, %v1787
          %v1789 = vrot.slane %v1761, %v1788
          %v1794 = vmul.f32 %v1762, %v1777
          %v1795 = vmul.f32 %v1763, %v1777
          %v1796 = vmul.f32 %v1764, %v1781
          %v1797 = vmul.f32 %v1765, %v1781
          %v1798 = vmul.f32 %v1766, %v1785
          %v1799 = vmul.f32 %v1767, %v1785
          %v1800 = vmul.f32 %v1768, %v1789
          %v1801 = vmul.f32 %v1769, %v1789
          %1802 = vst.msk [vmem:[%s321] sm:$0xff] %vm1045, %v1794
          %1803 = vst.msk [vmem:[%s321 + $0x8] sm:$0xff] %vm1045, %v1795
          %1804 = vst.msk [vmem:[%s321 + $0x10] sm:$0xff] %vm1045, %v1796
          %1805 = vst.msk [vmem:[%s321 + $0x18] sm:$0xff] %vm1045, %v1797
          %1806 = vst.msk [vmem:[%s321 + $0x20] sm:$0xff] %vm1045, %v1798
          %1807 = vst.msk [vmem:[%s321 + $0x28] sm:$0xff] %vm1045, %v1799
          %1808 = vst.msk [vmem:[%s321 + $0x30] sm:$0xff] %vm1045, %v1800
          %1809 = vst.msk [vmem:[%s321 + $0x38] sm:$0xff] %vm1045, %v1801
        $region52: #{tpu_custom_call.1} parent=31 // pred_fallthru
          _
        %s1810 = sand.u32 %s151, 1
        %s1811 = scalar_lea.sflag [#allocation8], %s1810
        %s1812 = sand.u32 %s151, 1
        %s1813 = smul.addr %s1812, 64
        %s1814 = scalar_lea.vmem [#allocation12], %s1813
        // Predicated region
        $region53: #{tpu_custom_call.1} parent=31 // pred_check
          %p1815 = pneg %p161
        $region54: #{tpu_custom_call.1} parent=31 // pred_check_branch
          %1817 = sbr.rel (%p1815) target = $region56
        $region55: #{tpu_custom_call.1} parent=31 // pred_region
          %s1818 = smul.u32 4, %s30
          %s1820 = ssub.s32 1024, 1024
          %1821 = vsyncadd %s1811, %s1820
          %s1822 = smul.addr %s1818, 2
          %s1823 = sadd.s32 %s31, %s1822
          %s1824 = smul.addr %s29, 8
          %s1825 = sadd.s32 %s1823, %s1824
          %s1826 = smul.addr %s1825, 128
          %s1827 = scalar_lea.hbm %s3, %s1826
          %s1828 = sshll.u32 %s1814, 4
          %s1829 = int_to_ptr.vmem [resolvable:$true] %s1828
          %1834 = dma.vmem_to_hbm [thread:$0]  %s1829, 1024, %s1827, %s1811, 128, 128, 8
        $region56: #{tpu_custom_call.1} parent=31 // pred_fallthru
          _
      $region32: #{tpu_custom_call.1} parent=5 // pred_fallthru
        _
      %p1835 = scmp.le.s32.totalorder 2, %s18
      // Predicated region
      $region57: #{tpu_custom_call.1} parent=5 // pred_check
        %p1836 = pneg %p1835
      $region58: #{tpu_custom_call.1} parent=5 // pred_check_branch
        %1838 = sbr.rel (%p1836) target = $region60
      $region59: #{tpu_custom_call.1} parent=5 // pred_region
        %s1839 = ssub.s32 %s18, 2
        // Predicated region
        $region61: #{tpu_custom_call.1} parent=59 // pred_check
          %p1840 = pneg %p167
        $region62: #{tpu_custom_call.1} parent=59 // pred_check_branch
          %1842 = sbr.rel (%p1840) target = $region64
        $region63: #{tpu_custom_call.1} parent=59 // pred_region
          %s1843 = sand.u32 %s152, 1
          %s1844 = scalar_lea.sflag [#allocation8], %s1843
          %s1845 = sand.u32 %s152, 1
          %s1846 = smul.addr %s1845, 64
          %s1847 = scalar_lea.vmem [#allocation12], %s1846
          %1848 = dma.done %s1844, 1024
        $region64: #{tpu_custom_call.1} parent=59 // pred_fallthru
          _
      $region60: #{tpu_custom_call.1} parent=5 // pred_fallthru
        _
    $region6: #{tpu_custom_call.1} parent=1 // loop_footer
      %s22 = sadd.s32 1, %s18
    $region7: #{tpu_custom_call.1} parent=1 // loop_footer_branch
      %17 = sbr.rel target = $region3
    $region8: #{tpu_custom_call.1} parent=1 // loop_exit
      _
    %1849 = vsyncpa [#allocation7], 1
    %s1850 = scalar_lea.sflag [#allocation7], 1
    %1851 = vsyncpa %s1850, 1
    %1852 = vsyncpa [#allocation10], 1
    %s1853 = scalar_lea.sflag [#allocation10], 1
    %1854 = vsyncpa %s1853, 1
    %1855 = vsyncpa [#allocation8], 1
    %s1856 = scalar_lea.sflag [#allocation8], 1
    %1857 = vsyncpa %s1856, 1

</llo_original>
